<compile_context>
chip_gen: v6e
topology: v6e:2x2x1
jax: 0.10.0
libtpu: 0.0.40
codegen_flags: <defaults>
</compile_context>

<pallas_src>
import math
from functools import partial

import jax
import jax.numpy as jnp
from jax import lax
from jax.experimental import pallas as pl
from jax.experimental.pallas import tpu as pltpu


_EPS = 1e-5
_INV_SQRT2 = 1.0 / math.sqrt(2.0)


# ----------------------------------------------------------------------------
# In-kernel helpers
# ----------------------------------------------------------------------------
def _gelu_exact(x):
    # nn.GELU() default (erf-based, exact)
    return 0.5 * x * (1.0 + lax.erf(x * _INV_SQRT2))


# ----------------------------------------------------------------------------
# Single fused kernel: all depth layers in one invocation (no grid)
# ----------------------------------------------------------------------------
def _make_captn_kernel(layer_meta, degree, E):
    """layer_meta: static tuple of (C, col_off) per layer.
    Ref order: [x, w, aux, pool] * n_layers, scal(SMEM), out(3E, B)."""
    n_layers = len(layer_meta)

    def kernel(*refs):
        scal_ref = refs[4 * n_layers]
        out_ref = refs[4 * n_layers + 1]

        for li, (C, off) in enumerate(layer_meta):
            x_ref, w_ref, aux_ref, pool_ref = refs[4 * li:4 * li + 4]
            C3 = 3 * C

            # ---- per-layer scalars (SMEM): [sa0, sa1, s_tfa, s_ddp, coeffs...]
            sa0 = scal_ref[li, 0]
            sa1 = scal_ref[li, 1]
            s_tfa = scal_ref[li, 2]
            s_ddp = scal_ref[li, 3]

            # ---- packed per-channel column: [bnt_s; bnt_b; bnx_s; bnx_b; b_cat]
            aux = aux_ref[...]                             # (7C+1, 1) f32
            bnt_s = aux[0:C]
            bnt_b = aux[C:2 * C]
            bnx_s = aux[2 * C:3 * C]
            bnx_b = aux[3 * C:4 * C]
            b_cat = aux[4 * C:4 * C + C3 + 1]

            x = x_ref[...]                                 # (C, N) bf16
            pool = pool_ref[...]                           # (N, B) bf16 (1/P exact)

            # ---- OBFM first: after this, x is only live as an MXU operand,
            #      and the (C, B) mean/BN retire early (short live ranges).
            mean_x = jnp.dot(x, pool,
                             preferred_element_type=jnp.float32)          # (C, B)
            out_ref[off:off + C, :] = mean_x * bnx_s + bnx_b

            # ---- one wide MXU matmul: [TFA | DDP p1 | DDP p2 | channel-mean]
            #      (depth perms + DDP BNs folded host-side into w/b)
            conv = jnp.dot(w_ref[...], x,
                           preferred_element_type=jnp.float32) + b_cat    # (3C+1, N)
            conv_t = conv[0:C]
            avg = conv[C3:C3 + 1]                          # folded channel mean (1, N)
            mx = jnp.max(conv_t, axis=0, keepdims=True)    # (1, N) XLU reduce

            attn = jax.nn.sigmoid(sa0 * avg + sa1 * mx)    # (1, N)
            tfa = _gelu_exact((conv_t * attn + conv_t) * bnt_s + bnt_b)

            # ---- ELTA combine on (C, N); accumulate one GELU at a time to keep
            #      live vregs low.  Pool once afterwards (linearity of the mean).
            elta = s_tfa * tfa
            elta = elta + s_ddp * _gelu_exact(conv[C:2 * C])
            elta = elta + s_ddp * _gelu_exact(conv[2 * C:C3])

            oelta = jnp.dot(elta.astype(jnp.bfloat16), pool,
                            preferred_element_type=jnp.float32)           # (C, B)
            out_ref[E + off:E + off + C, :] = oelta

            # ---- LCP: learnable Chebyshev polynomial (coeffs pre-sigmoided)
            res = scal_ref[li, 4] * jnp.ones_like(oelta)
            if degree >= 1:
                t0 = jnp.ones_like(oelta)
                t1 = oelta
                res = res + scal_ref[li, 5] * t1
                for i in range(2, degree + 1):
                    t0, t1 = t1, 2.0 * oelta * t1 - t0
                    res = res + scal_ref[li, 4 + i] * t1
            out_ref[2 * E + off:2 * E + off + C, :] = res

    return kernel


def captn_fused_pallas(layer_inputs, scalars, B, degree, E):
    """layer_inputs: list of dicts with
         x:(C,N) bf16, w:(3C+1,C) bf16, aux:(7C+1,1) f32, pool:(N,B) bf16.
       scalars: (n_layers, 4+degree+1) f32 (SMEM).
       Returns packed (3E, B) f32, rows = [obfm | oelta | lcp]."""

    def vmem_full(shape):
        return pl.BlockSpec(shape, lambda _n=len(shape): (0,) * _n)

    smem = pl.BlockSpec(memory_space=pltpu.MemorySpace.SMEM)

    layer_meta = []
    in_specs, args = [], []
    off = 0
    for li in layer_inputs:
        C = li["x"].shape[0]
        layer_meta.append((C, off))
        off += C
        for name in ("x", "w", "aux", "pool"):
            arr = li[name]
            in_specs.append(vmem_full(arr.shape))
            args.append(arr)
    in_specs.append(smem)
    args.append(scalars)

    return pl.pallas_call(
        _make_captn_kernel(tuple(layer_meta), degree, E),
        in_specs=in_specs,
        out_specs=vmem_full((3 * E, B)),
        out_shape=jax.ShapeDtypeStruct((3 * E, B), jnp.float32),
    )(*args)


# ----------------------------------------------------------------------------
# Parameter initialization (deterministic, synthetic) and layout conversion
# ----------------------------------------------------------------------------
def init_layer_params_torch(key, C, degree):
    """Parameters in PyTorch layouts (for the pure-JAX reference)."""
    ks = jax.random.split(key, 16)
    conv_w = lambda k: (jax.random.normal(k, (C, C), jnp.float32) / math.sqrt(C))
    conv_b = lambda k: (0.05 * jax.random.normal(k, (C,), jnp.float32))

    def bn(kg, kb):
        gamma = 1.0 + 0.1 * jax.random.normal(kg, (C,), jnp.float32)
        beta = 0.1 * jax.random.normal(kb, (C,), jnp.float32)
        mean = jnp.zeros((C,), jnp.float32)   # default running stats
        var = jnp.ones((C,), jnp.float32)
        return (gamma, beta, mean, var)

    return dict(
        tfa_w=conv_w(ks[0]), tfa_b=conv_b(ks[1]), tfa_bn=bn(ks[2], ks[3]),
        sa_w=jax.random.normal(ks[4], (2,), jnp.float32) / math.sqrt(2.0),
        ddp1_w=conv_w(ks[5]), ddp1_b=conv_b(ks[6]), ddp1_bn=bn(ks[7], ks[8]),
        ddp2_w=conv_w(ks[9]), ddp2_b=conv_b(ks[10]), ddp2_bn=bn(ks[11], ks[12]),
        bnx=bn(ks[13], ks[14]),
        s_tfa=jnp.float32(1.0), s_ddp=jnp.float32(0.4),          # ELTA scalings (as in __init__)
        coeffs=jnp.ones((degree + 1,), jnp.float32),             # LCP coefficients
    )


def _fold_bn(bn_params):
    gamma, beta, mean, var = bn_params
    scale = gamma / jnp.sqrt(var + _EPS)
    bias = beta - mean * scale
    return scale, bias


def _perm_for_groups(C, groups):
    return jnp.arange(C).reshape(groups, C // groups).T.reshape(-1)


def to_kernel_inputs(x_nchw, tp):
    """Fold depth permutations + DDP BatchNorms into the conv weights, stack the
    three 1x1 convs plus a channel-mean row into one (3C+1, C) weight, pack all
    per-channel vectors into one 'aux' column, pre-clip/sigmoid the scalars, and
    build the per-batch pooling matrix.  Runs once under jit (constant-folded)."""
    B, C, H, W = x_nchw.shape
    P = H * W

    inv4 = jnp.argsort(_perm_for_groups(C, 4))
    inv8 = jnp.argsort(_perm_for_groups(C, 8))

    bnt_s, bnt_b = _fold_bn(tp["tfa_bn"])
    bn1_s, bn1_b = _fold_bn(tp["ddp1_bn"])
    bn2_s, bn2_b = _fold_bn(tp["ddp2_bn"])
    bnx_s, bnx_b = _fold_bn(tp["bnx"])

    # DDP: conv(depth_perm(x)) == x-convolved-with-permuted-input-channels;
    # BatchNorm (eval) folds into a per-output-channel scale/bias of the conv.
    w1 = tp["ddp1_w"][:, inv4] * bn1_s[:, None]
    b1 = tp["ddp1_b"] * bn1_s + bn1_b
    w2 = tp["ddp2_w"][:, inv8] * bn2_s[:, None]
    b2 = tp["ddp2_b"] * bn2_s + bn2_b

    # Extra row == channel mean of the TFA conv output (spatial-attention 'avg'),
    # so the XLU cross-sublane mean is replaced by a free MXU row.
    w_avg = jnp.mean(tp["tfa_w"], axis=0, keepdims=True)     # (1, C)
    b_avg = jnp.mean(tp["tfa_b"], keepdims=True)             # (1,)

    w_cat = jnp.concatenate([tp["tfa_w"], w1, w2, w_avg], axis=0)      # (3C+1, C)
    b_cat = jnp.concatenate([tp["tfa_b"], b1, b2, b_avg], axis=0)      # (3C+1,)

    # packed per-channel column: [bnt_s; bnt_b; bnx_s; bnx_b; b_cat]
    aux = jnp.concatenate([bnt_s, bnt_b, bnx_s, bnx_b, b_cat])[:, None]  # (7C+1, 1)

    # per-batch mean-pooling matrix over the flattened pixel axis (N=B*P, B);
    # 1/P is a power of two -> exact in bf16.
    pool = jnp.repeat(jnp.eye(B, dtype=jnp.float32), P, axis=0) / float(P)

    # channels-first flattened pixels: lane axis = B*H*W (multiple of 128)
    x_cn = jnp.transpose(x_nchw, (1, 0, 2, 3)).reshape(C, B * P)

    # per-layer scalars: [sa0, sa1, clamp(s_tfa), clamp(s_ddp), sigmoid(coeffs)...]
    scal = jnp.concatenate([
        tp["sa_w"],
        jnp.clip(jnp.stack([tp["s_tfa"], tp["s_ddp"]]), 0.0, 1.0),
        jax.nn.sigmoid(tp["coeffs"]),
    ])

    return dict(
        x=x_cn.astype(jnp.bfloat16),        # MXU truncates to bf16 anyway
        w=w_cat.astype(jnp.bfloat16),
        aux=aux.astype(jnp.float32),
        pool=pool.astype(jnp.bfloat16),
    ), scal


# ----------------------------------------------------------------------------
# CAPTN forward (return_patch=False path), fully jitted
# ----------------------------------------------------------------------------
@partial(jax.jit, static_argnames=("degree",))
def captn_forward(x_list_nchw, layer_params_torch, w_cls, *, degree):
    B = x_list_nchw[0].shape[0]
    layer_inputs, scal_rows = [], []
    E = 0
    for x_nchw, tp in zip(x_list_nchw, layer_params_torch):
        li, scal = to_kernel_inputs(x_nchw, tp)
        layer_inputs.append(li)
        scal_rows.append(scal)
        E += x_nchw.shape[1]
    scalars = jnp.stack(scal_rows, axis=0)                     # (n_layers, 4+deg+1)

    # ONE fused launch for all layers; packed (3E, B) output.
    packed = captn_fused_pallas(layer_inputs, scalars, B, degree, E)
    obfm_combined, oelta_combined, lcp_combined = jnp.split(packed.T, 3, axis=1)

    # Tiny (B, E) x (E, n_classes) classifier: leave to XLA (a Pallas launch here
    # would be pure overhead with a masked 5-lane-wide store).
    logits = jnp.dot(lcp_combined, w_cls.T)
    return logits, obfm_combined, oelta_combined


# ----------------------------------------------------------------------------
# Pure-JAX reference (PyTorch semantics, NCHW) — for correctness check
# ----------------------------------------------------------------------------
def ref_layer(x_nchw, tp, degree):
    B, C, H, W = x_nchw.shape
    gelu = lambda v: jax.nn.gelu(v, approximate=False)

    def bn_eval(y, bnp):
        gamma, beta, mean, var = bnp
        sc = gamma / jnp.sqrt(var + _EPS)
        return y * sc[None, :, None, None] + (beta - mean * sc)[None, :, None, None]

    def conv1x1(y, w, b):
        out = jnp.einsum('bchw,oc->bohw', y, w)
        return out + b[None, :, None, None]

    def depth_perm(y, groups):
        perm = _perm_for_groups(C, groups)
        return y[:, perm]

    # TFA
    conv_t = conv1x1(x_nchw, tp["tfa_w"], tp["tfa_b"])
    avg = jnp.mean(conv_t, axis=1, keepdims=True)
    mx = jnp.max(conv_t, axis=1, keepdims=True)
    attn = jax.nn.sigmoid(tp["sa_w"][0] * avg + tp["sa_w"][1] * mx)
    tfa = gelu(bn_eval(conv_t * attn + conv_t, tp["tfa_bn"]))
    # DDP
    p1 = gelu(bn_eval(conv1x1(depth_perm(x_nchw, 4), tp["ddp1_w"], tp["ddp1_b"]), tp["ddp1_bn"]))
    p2 = gelu(bn_eval(conv1x1(depth_perm(x_nchw, 8), tp["ddp2_w"], tp["ddp2_b"]), tp["ddp2_bn"]))
    ddp = p1 + p2
    # ELTA
    elta = jnp.clip(tp["s_tfa"], 0.0, 1.0) * tfa + jnp.clip(tp["s_ddp"], 0.0, 1.0) * ddp
    # pooling
    obfm = jnp.mean(bn_eval(x_nchw, tp["bnx"]), axis=(-2, -1))
    oelta = jnp.mean(elta, axis=(-2, -1))
    # LCP
    c = jax.nn.sigmoid(tp["coeffs"])

    def cheb(n):
        if n == 0:
            return jnp.ones_like(oelta)
        if n == 1:
            return oelta
        t0, t1 = jnp.ones_like(oelta), oelta
        for _ in range(2, n + 1):
            t0, t1 = t1, 2.0 * oelta * t1 - t0
        return t1

    res = c[0] * cheb(0)
    for i in range(1, degree + 1):
        res = res + c[i] * cheb(i)
    return obfm, oelta, res


def captn_forward_ref(x_list_nchw, layer_params_torch, w_cls, degree):
    obfm_outs, oelta_outs, lcp_outs = [], [], []
    for x_nchw, tp in zip(x_list_nchw, layer_params_torch):
        obfm, oelta, lcp_out = ref_layer(x_nchw, tp, degree)
        obfm_outs.append(obfm)
        oelta_outs.append(oelta)
        lcp_outs.append(lcp_out)
    obfm_combined = jnp.concatenate(obfm_outs, axis=1)
    oelta_combined = jnp.concatenate(oelta_outs, axis=1)
    lcp_combined = jnp.concatenate(lcp_outs, axis=1)
    logits = jnp.einsum('be,ne->bn', lcp_combined, w_cls)
    return logits, obfm_combined, oelta_combined


# ----------------------------------------------------------------------------
# Main
# ----------------------------------------------------------------------------
if __name__ == "__main__":
    key = jax.random.PRNGKey(0)
    B = 2
    n_classes = 5
    degree = 3                               # cfg.chebyshev_polynomial_degree
    depth_dims = [16, 32]                    # selected backbone depth dims (cfg.common.layers = 2)
    spatial = [16, 8]                        # feature-map resolutions per depth
    embedding_dim = sum(depth_dims)          # 48

    # Synthetic backbone feature maps (NCHW, as the PyTorch backbone would emit).
    k_feat, k_par, k_cls = jax.random.split(key, 3)
    feat_keys = jax.random.split(k_feat, len(depth_dims))
    x_list = [jax.random.normal(fk, (B, C, S, S), jnp.float32)
              for fk, C, S in zip(feat_keys, depth_dims, spatial)]

    # Deterministic parameter init.
    par_keys = jax.random.split(k_par, len(depth_dims))
    layer_params = [init_layer_params_torch(pk, C, degree)
                    for pk, C in zip(par_keys, depth_dims)]
    # classifier: glorot, no bias, shape (n_classes, embedding_dim)
    w_cls = jax.random.normal(k_cls, (n_classes, embedding_dim), jnp.float32) * \
        math.sqrt(2.0 / (n_classes + embedding_dim))

    # Pallas forward (single jit: weight folding + layout glue + ONE fused kernel + classifier)
    logits, obfm, oelta = captn_forward(x_list, layer_params, w_cls, degree=degree)
    jax.block_until_ready((logits, obfm, oelta))

    # Pure-JAX reference (PyTorch op ordering) check.
    # Tolerance note: the kernel uses bf16-operand / f32-accumulate MXU matmuls
    # (conv with DDP BN folded into the weights, default-precision pooling,
    # channel-mean folded as an extra matmul row), while the reference keeps
    # PyTorch's f32 conv->BN ordering and exact means; divergence is ~1e-3 on the
    # pooled features and is amplified ~5-10x by the Chebyshev expansion on the
    # logits, hence per-output tolerances below.
    logits_r, obfm_r, oelta_r = captn_forward_ref(x_list, layer_params, w_cls, degree)
    checks = [(obfm, obfm_r, "obfm", 3e-3),
              (oelta, oelta_r, "oelta", 5e-3),
              (logits, logits_r, "logits", 1e-2)]
    for a, b, name, tol in checks:
        err = float(jnp.max(jnp.abs(a - b)))
        assert err < tol, f"{name} mismatch: max abs err {err} (tol {tol})"

    assert logits.shape == (B, n_classes)
    assert obfm.shape == (B, embedding_dim)
    assert oelta.shape == (B, embedding_dim)
    print("KERNEL_OK")
</pallas_src>

<mosaic_0001>
module attributes {stable_mosaic.version = 11 : i64} {
  func.func @kernel(%arg0: memref<16x512xbf16, #tpu.memory_space<vmem>>, %arg1: memref<49x16xbf16, #tpu.memory_space<vmem>>, %arg2: memref<113x1xf32, #tpu.memory_space<vmem>>, %arg3: memref<512x2xbf16, #tpu.memory_space<vmem>>, %arg4: memref<32x128xbf16, #tpu.memory_space<vmem>>, %arg5: memref<97x32xbf16, #tpu.memory_space<vmem>>, %arg6: memref<225x1xf32, #tpu.memory_space<vmem>>, %arg7: memref<128x2xbf16, #tpu.memory_space<vmem>>, %arg8: memref<2x8xf32, #tpu.memory_space<smem>>, %arg9: memref<144x2xf32, #tpu.memory_space<vmem>>) attributes {dimension_semantics = [], scalar_prefetch = 0 : i64, scratch_operands = 0 : i64, tpu.core_type = #tpu.core_type<tc>} {
    %c0 = arith.constant 0 : index
    %c0_0 = arith.constant 0 : index
    %0 = memref.load %arg8[%c0, %c0_0] : memref<2x8xf32, #tpu.memory_space<smem>>
    %c0_1 = arith.constant 0 : index
    %c1 = arith.constant 1 : index
    %1 = memref.load %arg8[%c0_1, %c1] : memref<2x8xf32, #tpu.memory_space<smem>>
    %c0_2 = arith.constant 0 : index
    %c2 = arith.constant 2 : index
    %2 = memref.load %arg8[%c0_2, %c2] : memref<2x8xf32, #tpu.memory_space<smem>>
    %c0_3 = arith.constant 0 : index
    %c3 = arith.constant 3 : index
    %3 = memref.load %arg8[%c0_3, %c3] : memref<2x8xf32, #tpu.memory_space<smem>>
    %c0_4 = arith.constant 0 : index
    %c0_5 = arith.constant 0 : index
    %4 = vector.load %arg2[%c0_4, %c0_5] : memref<113x1xf32, #tpu.memory_space<vmem>>, vector<113x1xf32>
    %5 = vector.extract_strided_slice %4 {offsets = [0, 0], sizes = [16, 1], strides = [1, 1]} : vector<113x1xf32> to vector<16x1xf32>
    %6 = vector.extract_strided_slice %4 {offsets = [16, 0], sizes = [16, 1], strides = [1, 1]} : vector<113x1xf32> to vector<16x1xf32>
    %7 = vector.extract_strided_slice %4 {offsets = [32, 0], sizes = [16, 1], strides = [1, 1]} : vector<113x1xf32> to vector<16x1xf32>
    %8 = vector.extract_strided_slice %4 {offsets = [48, 0], sizes = [16, 1], strides = [1, 1]} : vector<113x1xf32> to vector<16x1xf32>
    %9 = vector.extract_strided_slice %4 {offsets = [64, 0], sizes = [49, 1], strides = [1, 1]} : vector<113x1xf32> to vector<49x1xf32>
    %c0_6 = arith.constant 0 : index
    %c0_7 = arith.constant 0 : index
    %10 = vector.load %arg0[%c0_6, %c0_7] : memref<16x512xbf16, #tpu.memory_space<vmem>>, vector<16x512xbf16>
    %c0_8 = arith.constant 0 : index
    %c0_9 = arith.constant 0 : index
    %11 = vector.load %arg3[%c0_8, %c0_9] : memref<512x2xbf16, #tpu.memory_space<vmem>>, vector<512x2xbf16>
    %cst = arith.constant dense<0.000000e+00> : vector<16x2xf32>
    %12 = tpu.matmul %10, %11, %cst {dimension_numbers = #tpu.dot_dimension_numbers<[1], [0], [0], [1], [0, 0, 1, 1], [], []>} : vector<16x512xbf16>, vector<512x2xbf16>, vector<16x2xf32> -> vector<16x2xf32>
    %13 = vector.broadcast %7 : vector<16x1xf32> to vector<16x2xf32>
    %14 = arith.mulf %12, %13 : vector<16x2xf32>
    %15 = vector.broadcast %8 : vector<16x1xf32> to vector<16x2xf32>
    %16 = arith.addf %14, %15 : vector<16x2xf32>
    %c0_10 = arith.constant 0 : index
    %c0_11 = arith.constant 0 : index
    %17 = vector.load %arg9[%c0_10, %c0_11] : memref<144x2xf32, #tpu.memory_space<vmem>>, vector<16x2xf32>
    tpu.vector_store %arg9[%c0_10, %c0_11], %16 {strides = array<i32>} : memref<144x2xf32, #tpu.memory_space<vmem>>, vector<16x2xf32>,
    %c0_12 = arith.constant 0 : index
    %c0_13 = arith.constant 0 : index
    %18 = vector.load %arg1[%c0_12, %c0_13] : memref<49x16xbf16, #tpu.memory_space<vmem>>, vector<49x16xbf16>
    %cst_14 = arith.constant dense<0.000000e+00> : vector<49x512xf32>
    %19 = tpu.matmul %18, %10, %cst_14 {dimension_numbers = #tpu.dot_dimension_numbers<[1], [0], [0], [1], [0, 0, 1, 1], [], []>} : vector<49x16xbf16>, vector<16x512xbf16>, vector<49x512xf32> -> vector<49x512xf32>
    %20 = vector.broadcast %9 : vector<49x1xf32> to vector<49x512xf32>
    %21 = arith.addf %19, %20 : vector<49x512xf32>
    %22 = vector.extract_strided_slice %21 {offsets = [0, 0], sizes = [16, 512], strides = [1, 1]} : vector<49x512xf32> to vector<16x512xf32>
    %23 = vector.extract_strided_slice %21 {offsets = [48, 0], sizes = [1, 512], strides = [1, 1]} : vector<49x512xf32> to vector<1x512xf32>
    %cst_15 = arith.constant dense<0xFF800000> : vector<512xf32>
    %24 = vector.multi_reduction <maximumf>, %22, %cst_15 [0] : vector<16x512xf32> to vector<512xf32>
    %25 = vector.shape_cast %24 : vector<512xf32> to vector<1x512xf32>
    %26 = vector.broadcast %0 : f32 to vector<1x512xf32>
    %27 = arith.mulf %26, %23 : vector<1x512xf32>
    %28 = vector.broadcast %1 : f32 to vector<1x512xf32>
    %29 = arith.mulf %28, %25 : vector<1x512xf32>
    %30 = arith.addf %27, %29 : vector<1x512xf32>
    %31 = arith.negf %30 : vector<1x512xf32>
    %32 = math.exp %31 : vector<1x512xf32>
    %cst_16 = arith.constant 1.000000e+00 : f32
    %33 = vector.broadcast %cst_16 : f32 to vector<1x512xf32>
    %34 = arith.addf %33, %32 : vector<1x512xf32>
    %35 = arith.divf %33, %34 : vector<1x512xf32>
    %36 = vector.broadcast %35 : vector<1x512xf32> to vector<16x512xf32>
    %37 = arith.mulf %22, %36 : vector<16x512xf32>
    %38 = arith.addf %37, %22 : vector<16x512xf32>
    %39 = vector.broadcast %5 : vector<16x1xf32> to vector<16x512xf32>
    %40 = arith.mulf %38, %39 : vector<16x512xf32>
    %41 = vector.broadcast %6 : vector<16x1xf32> to vector<16x512xf32>
    %42 = arith.addf %40, %41 : vector<16x512xf32>
    %cst_17 = arith.constant 5.000000e-01 : f32
    %43 = vector.broadcast %cst_17 : f32 to vector<16x512xf32>
    %44 = arith.mulf %43, %42 : vector<16x512xf32>
    %cst_18 = arith.constant 0.707106769 : f32
    %45 = vector.broadcast %cst_18 : f32 to vector<16x512xf32>
    %46 = arith.mulf %42, %45 : vector<16x512xf32>
    %47 = math.erf %46 : vector<16x512xf32>
    %cst_19 = arith.constant 1.000000e+00 : f32
    %48 = vector.broadcast %cst_19 : f32 to vector<16x512xf32>
    %49 = arith.addf %48, %47 : vector<16x512xf32>
    %50 = arith.mulf %44, %49 : vector<16x512xf32>
    %51 = vector.broadcast %2 : f32 to vector<16x512xf32>
    %52 = arith.mulf %51, %50 : vector<16x512xf32>
    %53 = vector.extract_strided_slice %21 {offsets = [16, 0], sizes = [16, 512], strides = [1, 1]} : vector<49x512xf32> to vector<16x512xf32>
    %cst_20 = arith.constant 5.000000e-01 : f32
    %54 = vector.broadcast %cst_20 : f32 to vector<16x512xf32>
    %55 = arith.mulf %54, %53 : vector<16x512xf32>
    %cst_21 = arith.constant 0.707106769 : f32
    %56 = vector.broadcast %cst_21 : f32 to vector<16x512xf32>
    %57 = arith.mulf %53, %56 : vector<16x512xf32>
    %58 = math.erf %57 : vector<16x512xf32>
    %cst_22 = arith.constant 1.000000e+00 : f32
    %59 = vector.broadcast %cst_22 : f32 to vector<16x512xf32>
    %60 = arith.addf %59, %58 : vector<16x512xf32>
    %61 = arith.mulf %55, %60 : vector<16x512xf32>
    %62 = vector.broadcast %3 : f32 to vector<16x512xf32>
    %63 = arith.mulf %62, %61 : vector<16x512xf32>
    %64 = arith.addf %52, %63 : vector<16x512xf32>
    %65 = vector.extract_strided_slice %21 {offsets = [32, 0], sizes = [16, 512], strides = [1, 1]} : vector<49x512xf32> to vector<16x512xf32>
    %cst_23 = arith.constant 5.000000e-01 : f32
    %66 = vector.broadcast %cst_23 : f32 to vector<16x512xf32>
    %67 = arith.mulf %66, %65 : vector<16x512xf32>
    %cst_24 = arith.constant 0.707106769 : f32
    %68 = vector.broadcast %cst_24 : f32 to vector<16x512xf32>
    %69 = arith.mulf %65, %68 : vector<16x512xf32>
    %70 = math.erf %69 : vector<16x512xf32>
    %cst_25 = arith.constant 1.000000e+00 : f32
    %71 = vector.broadcast %cst_25 : f32 to vector<16x512xf32>
    %72 = arith.addf %71, %70 : vector<16x512xf32>
    %73 = arith.mulf %67, %72 : vector<16x512xf32>
    %74 = vector.broadcast %3 : f32 to vector<16x512xf32>
    %75 = arith.mulf %74, %73 : vector<16x512xf32>
    %76 = arith.addf %64, %75 : vector<16x512xf32>
    %77 = arith.truncf %76 : vector<16x512xf32> to vector<16x512xbf16>
    %cst_26 = arith.constant dense<0.000000e+00> : vector<16x2xf32>
    %78 = tpu.matmul %77, %11, %cst_26 {dimension_numbers = #tpu.dot_dimension_numbers<[1], [0], [0], [1], [0, 0, 1, 1], [], []>} : vector<16x512xbf16>, vector<512x2xbf16>, vector<16x2xf32> -> vector<16x2xf32>
    %c48 = arith.constant 48 : index
    %c0_27 = arith.constant 0 : index
    %79 = vector.load %arg9[%c48, %c0_27] : memref<144x2xf32, #tpu.memory_space<vmem>>, vector<16x2xf32>
    tpu.vector_store %arg9[%c48, %c0_27], %78 {strides = array<i32>} : memref<144x2xf32, #tpu.memory_space<vmem>>, vector<16x2xf32>,
    %c0_28 = arith.constant 0 : index
    %c4 = arith.constant 4 : index
    %80 = memref.load %arg8[%c0_28, %c4] : memref<2x8xf32, #tpu.memory_space<smem>>
    %cst_29 = arith.constant 1.000000e+00 : f32
    %81 = vector.broadcast %cst_29 : f32 to vector<16x2xf32>
    %82 = vector.broadcast %80 : f32 to vector<16x2xf32>
    %83 = arith.mulf %82, %81 : vector<16x2xf32>
    %cst_30 = arith.constant 1.000000e+00 : f32
    %84 = vector.broadcast %cst_30 : f32 to vector<16x2xf32>
    %c0_31 = arith.constant 0 : index
    %c5 = arith.constant 5 : index
    %85 = memref.load %arg8[%c0_31, %c5] : memref<2x8xf32, #tpu.memory_space<smem>>
    %86 = vector.broadcast %85 : f32 to vector<16x2xf32>
    %87 = arith.mulf %86, %78 : vector<16x2xf32>
    %88 = arith.addf %83, %87 : vector<16x2xf32>
    %cst_32 = arith.constant 2.000000e+00 : f32
    %89 = vector.broadcast %cst_32 : f32 to vector<16x2xf32>
    %90 = arith.mulf %89, %78 : vector<16x2xf32>
    %91 = arith.mulf %90, %78 : vector<16x2xf32>
    %92 = arith.subf %91, %84 : vector<16x2xf32>
    %c0_33 = arith.constant 0 : index
    %c6 = arith.constant 6 : index
    %93 = memref.load %arg8[%c0_33, %c6] : memref<2x8xf32, #tpu.memory_space<smem>>
    %94 = vector.broadcast %93 : f32 to vector<16x2xf32>
    %95 = arith.mulf %94, %92 : vector<16x2xf32>
    %96 = arith.addf %88, %95 : vector<16x2xf32>
    %cst_34 = arith.constant 2.000000e+00 : f32
    %97 = vector.broadcast %cst_34 : f32 to vector<16x2xf32>
    %98 = arith.mulf %97, %78 : vector<16x2xf32>
    %99 = arith.mulf %98, %92 : vector<16x2xf32>
    %100 = arith.subf %99, %78 : vector<16x2xf32>
    %c0_35 = arith.constant 0 : index
    %c7 = arith.constant 7 : index
    %101 = memref.load %arg8[%c0_35, %c7] : memref<2x8xf32, #tpu.memory_space<smem>>
    %102 = vector.broadcast %101 : f32 to vector<16x2xf32>
    %103 = arith.mulf %102, %100 : vector<16x2xf32>
    %104 = arith.addf %96, %103 : vector<16x2xf32>
    %c96 = arith.constant 96 : index
    %c0_36 = arith.constant 0 : index
    %105 = vector.load %arg9[%c96, %c0_36] : memref<144x2xf32, #tpu.memory_space<vmem>>, vector<16x2xf32>
    tpu.vector_store %arg9[%c96, %c0_36], %104 {strides = array<i32>} : memref<144x2xf32, #tpu.memory_space<vmem>>, vector<16x2xf32>,
    %c1_37 = arith.constant 1 : index
    %c0_38 = arith.constant 0 : index
    %106 = memref.load %arg8[%c1_37, %c0_38] : memref<2x8xf32, #tpu.memory_space<smem>>
    %c1_39 = arith.constant 1 : index
    %c1_40 = arith.constant 1 : index
    %107 = memref.load %arg8[%c1_39, %c1_40] : memref<2x8xf32, #tpu.memory_space<smem>>
    %c1_41 = arith.constant 1 : index
    %c2_42 = arith.constant 2 : index
    %108 = memref.load %arg8[%c1_41, %c2_42] : memref<2x8xf32, #tpu.memory_space<smem>>
    %c1_43 = arith.constant 1 : index
    %c3_44 = arith.constant 3 : index
    %109 = memref.load %arg8[%c1_43, %c3_44] : memref<2x8xf32, #tpu.memory_space<smem>>
    %c0_45 = arith.constant 0 : index
    %c0_46 = arith.constant 0 : index
    %110 = vector.load %arg6[%c0_45, %c0_46] : memref<225x1xf32, #tpu.memory_space<vmem>>, vector<225x1xf32>
    %111 = vector.extract_strided_slice %110 {offsets = [0, 0], sizes = [32, 1], strides = [1, 1]} : vector<225x1xf32> to vector<32x1xf32>
    %112 = vector.extract_strided_slice %110 {offsets = [32, 0], sizes = [32, 1], strides = [1, 1]} : vector<225x1xf32> to vector<32x1xf32>
    %113 = vector.extract_strided_slice %110 {offsets = [64, 0], sizes = [32, 1], strides = [1, 1]} : vector<225x1xf32> to vector<32x1xf32>
    %114 = vector.extract_strided_slice %110 {offsets = [96, 0], sizes = [32, 1], strides = [1, 1]} : vector<225x1xf32> to vector<32x1xf32>
    %115 = vector.extract_strided_slice %110 {offsets = [128, 0], sizes = [97, 1], strides = [1, 1]} : vector<225x1xf32> to vector<97x1xf32>
    %c0_47 = arith.constant 0 : index
    %c0_48 = arith.constant 0 : index
    %116 = vector.load %arg4[%c0_47, %c0_48] : memref<32x128xbf16, #tpu.memory_space<vmem>>, vector<32x128xbf16>
    %c0_49 = arith.constant 0 : index
    %c0_50 = arith.constant 0 : index
    %117 = vector.load %arg7[%c0_49, %c0_50] : memref<128x2xbf16, #tpu.memory_space<vmem>>, vector<128x2xbf16>
    %cst_51 = arith.constant dense<0.000000e+00> : vector<32x2xf32>
    %118 = tpu.matmul %116, %117, %cst_51 {dimension_numbers = #tpu.dot_dimension_numbers<[1], [0], [0], [1], [0, 0, 1, 1], [], []>} : vector<32x128xbf16>, vector<128x2xbf16>, vector<32x2xf32> -> vector<32x2xf32>
    %119 = vector.broadcast %113 : vector<32x1xf32> to vector<32x2xf32>
    %120 = arith.mulf %118, %119 : vector<32x2xf32>
    %121 = vector.broadcast %114 : vector<32x1xf32> to vector<32x2xf32>
    %122 = arith.addf %120, %121 : vector<32x2xf32>
    %c16 = arith.constant 16 : index
    %c0_52 = arith.constant 0 : index
    %123 = vector.load %arg9[%c16, %c0_52] : memref<144x2xf32, #tpu.memory_space<vmem>>, vector<32x2xf32>
    tpu.vector_store %arg9[%c16, %c0_52], %122 {strides = array<i32>} : memref<144x2xf32, #tpu.memory_space<vmem>>, vector<32x2xf32>,
    %c0_53 = arith.constant 0 : index
    %c0_54 = arith.constant 0 : index
    %124 = vector.load %arg5[%c0_53, %c0_54] : memref<97x32xbf16, #tpu.memory_space<vmem>>, vector<97x32xbf16>
    %cst_55 = arith.constant dense<0.000000e+00> : vector<97x128xf32>
    %125 = tpu.matmul %124, %116, %cst_55 {dimension_numbers = #tpu.dot_dimension_numbers<[1], [0], [0], [1], [0, 0, 1, 1], [], []>} : vector<97x32xbf16>, vector<32x128xbf16>, vector<97x128xf32> -> vector<97x128xf32>
    %126 = vector.broadcast %115 : vector<97x1xf32> to vector<97x128xf32>
    %127 = arith.addf %125, %126 : vector<97x128xf32>
    %128 = vector.extract_strided_slice %127 {offsets = [0, 0], sizes = [32, 128], strides = [1, 1]} : vector<97x128xf32> to vector<32x128xf32>
    %129 = vector.extract_strided_slice %127 {offsets = [96, 0], sizes = [1, 128], strides = [1, 1]} : vector<97x128xf32> to vector<1x128xf32>
    %cst_56 = arith.constant dense<0xFF800000> : vector<128xf32>
    %130 = vector.multi_reduction <maximumf>, %128, %cst_56 [0] : vector<32x128xf32> to vector<128xf32>
    %131 = vector.shape_cast %130 : vector<128xf32> to vector<1x128xf32>
    %132 = vector.broadcast %106 : f32 to vector<1x128xf32>
    %133 = arith.mulf %132, %129 : vector<1x128xf32>
    %134 = vector.broadcast %107 : f32 to vector<1x128xf32>
    %135 = arith.mulf %134, %131 : vector<1x128xf32>
    %136 = arith.addf %133, %135 : vector<1x128xf32>
    %137 = arith.negf %136 : vector<1x128xf32>
    %138 = math.exp %137 : vector<1x128xf32>
    %cst_57 = arith.constant 1.000000e+00 : f32
    %139 = vector.broadcast %cst_57 : f32 to vector<1x128xf32>
    %140 = arith.addf %139, %138 : vector<1x128xf32>
    %141 = arith.divf %139, %140 : vector<1x128xf32>
    %142 = vector.broadcast %141 : vector<1x128xf32> to vector<32x128xf32>
    %143 = arith.mulf %128, %142 : vector<32x128xf32>
    %144 = arith.addf %143, %128 : vector<32x128xf32>
    %145 = vector.broadcast %111 : vector<32x1xf32> to vector<32x128xf32>
    %146 = arith.mulf %144, %145 : vector<32x128xf32>
    %147 = vector.broadcast %112 : vector<32x1xf32> to vector<32x128xf32>
    %148 = arith.addf %146, %147 : vector<32x128xf32>
    %cst_58 = arith.constant 5.000000e-01 : f32
    %149 = vector.broadcast %cst_58 : f32 to vector<32x128xf32>
    %150 = arith.mulf %149, %148 : vector<32x128xf32>
    %cst_59 = arith.constant 0.707106769 : f32
    %151 = vector.broadcast %cst_59 : f32 to vector<32x128xf32>
    %152 = arith.mulf %148, %151 : vector<32x128xf32>
    %153 = math.erf %152 : vector<32x128xf32>
    %cst_60 = arith.constant 1.000000e+00 : f32
    %154 = vector.broadcast %cst_60 : f32 to vector<32x128xf32>
    %155 = arith.addf %154, %153 : vector<32x128xf32>
    %156 = arith.mulf %150, %155 : vector<32x128xf32>
    %157 = vector.broadcast %108 : f32 to vector<32x128xf32>
    %158 = arith.mulf %157, %156 : vector<32x128xf32>
    %159 = vector.extract_strided_slice %127 {offsets = [32, 0], sizes = [32, 128], strides = [1, 1]} : vector<97x128xf32> to vector<32x128xf32>
    %cst_61 = arith.constant 5.000000e-01 : f32
    %160 = vector.broadcast %cst_61 : f32 to vector<32x128xf32>
    %161 = arith.mulf %160, %159 : vector<32x128xf32>
    %cst_62 = arith.constant 0.707106769 : f32
    %162 = vector.broadcast %cst_62 : f32 to vector<32x128xf32>
    %163 = arith.mulf %159, %162 : vector<32x128xf32>
    %164 = math.erf %163 : vector<32x128xf32>
    %cst_63 = arith.constant 1.000000e+00 : f32
    %165 = vector.broadcast %cst_63 : f32 to vector<32x128xf32>
    %166 = arith.addf %165, %164 : vector<32x128xf32>
    %167 = arith.mulf %161, %166 : vector<32x128xf32>
    %168 = vector.broadcast %109 : f32 to vector<32x128xf32>
    %169 = arith.mulf %168, %167 : vector<32x128xf32>
    %170 = arith.addf %158, %169 : vector<32x128xf32>
    %171 = vector.extract_strided_slice %127 {offsets = [64, 0], sizes = [32, 128], strides = [1, 1]} : vector<97x128xf32> to vector<32x128xf32>
    %cst_64 = arith.constant 5.000000e-01 : f32
    %172 = vector.broadcast %cst_64 : f32 to vector<32x128xf32>
    %173 = arith.mulf %172, %171 : vector<32x128xf32>
    %cst_65 = arith.constant 0.707106769 : f32
    %174 = vector.broadcast %cst_65 : f32 to vector<32x128xf32>
    %175 = arith.mulf %171, %174 : vector<32x128xf32>
    %176 = math.erf %175 : vector<32x128xf32>
    %cst_66 = arith.constant 1.000000e+00 : f32
    %177 = vector.broadcast %cst_66 : f32 to vector<32x128xf32>
    %178 = arith.addf %177, %176 : vector<32x128xf32>
    %179 = arith.mulf %173, %178 : vector<32x128xf32>
    %180 = vector.broadcast %109 : f32 to vector<32x128xf32>
    %181 = arith.mulf %180, %179 : vector<32x128xf32>
    %182 = arith.addf %170, %181 : vector<32x128xf32>
    %183 = arith.truncf %182 : vector<32x128xf32> to vector<32x128xbf16>
    %cst_67 = arith.constant dense<0.000000e+00> : vector<32x2xf32>
    %184 = tpu.matmul %183, %117, %cst_67 {dimension_numbers = #tpu.dot_dimension_numbers<[1], [0], [0], [1], [0, 0, 1, 1], [], []>} : vector<32x128xbf16>, vector<128x2xbf16>, vector<32x2xf32> -> vector<32x2xf32>
    %c64 = arith.constant 64 : index
    %c0_68 = arith.constant 0 : index
    %185 = vector.load %arg9[%c64, %c0_68] : memref<144x2xf32, #tpu.memory_space<vmem>>, vector<32x2xf32>
    tpu.vector_store %arg9[%c64, %c0_68], %184 {strides = array<i32>} : memref<144x2xf32, #tpu.memory_space<vmem>>, vector<32x2xf32>,
    %c1_69 = arith.constant 1 : index
    %c4_70 = arith.constant 4 : index
    %186 = memref.load %arg8[%c1_69, %c4_70] : memref<2x8xf32, #tpu.memory_space<smem>>
    %cst_71 = arith.constant 1.000000e+00 : f32
    %187 = vector.broadcast %cst_71 : f32 to vector<32x2xf32>
    %188 = vector.broadcast %186 : f32 to vector<32x2xf32>
    %189 = arith.mulf %188, %187 : vector<32x2xf32>
    %cst_72 = arith.constant 1.000000e+00 : f32
    %190 = vector.broadcast %cst_72 : f32 to vector<32x2xf32>
    %c1_73 = arith.constant 1 : index
    %c5_74 = arith.constant 5 : index
    %191 = memref.load %arg8[%c1_73, %c5_74] : memref<2x8xf32, #tpu.memory_space<smem>>
    %192 = vector.broadcast %191 : f32 to vector<32x2xf32>
    %193 = arith.mulf %192, %184 : vector<32x2xf32>
    %194 = arith.addf %189, %193 : vector<32x2xf32>
    %cst_75 = arith.constant 2.000000e+00 : f32
    %195 = vector.broadcast %cst_75 : f32 to vector<32x2xf32>
    %196 = arith.mulf %195, %184 : vector<32x2xf32>
    %197 = arith.mulf %196, %184 : vector<32x2xf32>
    %198 = arith.subf %197, %190 : vector<32x2xf32>
    %c1_76 = arith.constant 1 : index
    %c6_77 = arith.constant 6 : index
    %199 = memref.load %arg8[%c1_76, %c6_77] : memref<2x8xf32, #tpu.memory_space<smem>>
    %200 = vector.broadcast %199 : f32 to vector<32x2xf32>
    %201 = arith.mulf %200, %198 : vector<32x2xf32>
    %202 = arith.addf %194, %201 : vector<32x2xf32>
    %cst_78 = arith.constant 2.000000e+00 : f32
    %203 = vector.broadcast %cst_78 : f32 to vector<32x2xf32>
    %204 = arith.mulf %203, %184 : vector<32x2xf32>
    %205 = arith.mulf %204, %198 : vector<32x2xf32>
    %206 = arith.subf %205, %184 : vector<32x2xf32>
    %c1_79 = arith.constant 1 : index
    %c7_80 = arith.constant 7 : index
    %207 = memref.load %arg8[%c1_79, %c7_80] : memref<2x8xf32, #tpu.memory_space<smem>>
    %208 = vector.broadcast %207 : f32 to vector<32x2xf32>
    %209 = arith.mulf %208, %206 : vector<32x2xf32>
    %210 = arith.addf %202, %209 : vector<32x2xf32>
    %c112 = arith.constant 112 : index
    %c0_81 = arith.constant 0 : index
    %211 = vector.load %arg9[%c112, %c0_81] : memref<144x2xf32, #tpu.memory_space<vmem>>, vector<32x2xf32>
    tpu.vector_store %arg9[%c112, %c0_81], %210 {strides = array<i32>} : memref<144x2xf32, #tpu.memory_space<vmem>>, vector<32x2xf32>,
    return
  }
}

</mosaic_0001>

<llo_original>
// kernel: captn_forward.1
$region0: #{captn_forward.1}
  #allocation0 [shape = 'u32[]', space=smem, size = 0x4, offset = 0x4, fixed_abs, tag = 'smem constant byte address 0x4 - core index']
  #allocation1 [shape = 'u32[144,128]{1,0:T(1,128)}', space=vmem, size = 0x12000, scoped, tag = 'internal scratch']
  %s0 = inlined_call_operand.vmem [shape: bf16[16,512], index: 0, kind: input, shape index: {}]
  %s1 = inlined_call_operand.vmem [shape: bf16[49,16], index: 1, kind: input, shape index: {}]
  %s2 = inlined_call_operand.vmem [shape: f32[113,1], index: 2, kind: input, shape index: {}]
  %s3 = inlined_call_operand.vmem [shape: bf16[512,2], index: 3, kind: input, shape index: {}]
  %s4 = inlined_call_operand.vmem [shape: bf16[32,128], index: 4, kind: input, shape index: {}]
  %s5 = inlined_call_operand.vmem [shape: bf16[97,32], index: 5, kind: input, shape index: {}]
  %s6 = inlined_call_operand.vmem [shape: f32[225,1], index: 6, kind: input, shape index: {}]
  %s7 = inlined_call_operand.vmem [shape: bf16[128,2], index: 7, kind: input, shape index: {}]
  %s8 = inlined_call_operand.vmem [shape: f32[2,8], index: 8, kind: input, shape index: {}]
  %s9 = inlined_call_operand.vmem [shape: f32[144,2], index: 9, kind: output, shape index: {}]
  %s10 = sld [smem:[#allocation0]]
  $region50: #{captn_forward.1} parent=0
    _
  %s12 = ssub.s32 1, %s10
  %s13 = scalar_select 0, %s12, %s10
  $region1: #{captn_forward.1} parent=0
    #allocation2 [shape = 'u8[1024]{0}', space=smem, size = 0x400, scoped, tag = 'input window, operand 8, single buffered']
    #allocation3 [shape = 's32[1]{0}', space=sflag, size = 0x4, scoped, tag = 'scoped memory for captn_forward.1']
    %14 = vsyncpa [#allocation3], 0
    // Predicated region
    $region2: #{captn_forward.1} parent=1 // pred_check
      _
    $region3: #{captn_forward.1} parent=1 // pred_check_branch
      %16 = sbr.rel (0) target = $region5
    $region4: #{captn_forward.1} parent=1 // pred_region
      _
    $region5: #{captn_forward.1} parent=1 // pred_fallthru
      _
    // Predicated region
    $region6: #{captn_forward.1} parent=1 // pred_check
      _
    $region7: #{captn_forward.1} parent=1 // pred_check_branch
      %18 = sbr.rel (0) target = $region9
    $region8: #{captn_forward.1} parent=1 // pred_region
      _
    $region9: #{captn_forward.1} parent=1 // pred_fallthru
      _
    // Predicated region
    $region10: #{captn_forward.1} parent=1 // pred_check
      _
    $region11: #{captn_forward.1} parent=1 // pred_check_branch
      %20 = sbr.rel (0) target = $region13
    $region12: #{captn_forward.1} parent=1 // pred_region
      _
    $region13: #{captn_forward.1} parent=1 // pred_fallthru
      _
    // Predicated region
    $region14: #{captn_forward.1} parent=1 // pred_check
      _
    $region15: #{captn_forward.1} parent=1 // pred_check_branch
      %22 = sbr.rel (0) target = $region17
    $region16: #{captn_forward.1} parent=1 // pred_region
      _
    $region17: #{captn_forward.1} parent=1 // pred_fallthru
      _
    // Predicated region
    $region18: #{captn_forward.1} parent=1 // pred_check
      _
    $region19: #{captn_forward.1} parent=1 // pred_check_branch
      %24 = sbr.rel (0) target = $region21
    $region20: #{captn_forward.1} parent=1 // pred_region
      _
    $region21: #{captn_forward.1} parent=1 // pred_fallthru
      _
    // Predicated region
    $region22: #{captn_forward.1} parent=1 // pred_check
      _
    $region23: #{captn_forward.1} parent=1 // pred_check_branch
      %26 = sbr.rel (0) target = $region25
    $region24: #{captn_forward.1} parent=1 // pred_region
      _
    $region25: #{captn_forward.1} parent=1 // pred_fallthru
      _
    // Predicated region
    $region26: #{captn_forward.1} parent=1 // pred_check
      _
    $region27: #{captn_forward.1} parent=1 // pred_check_branch
      %28 = sbr.rel (0) target = $region29
    $region28: #{captn_forward.1} parent=1 // pred_region
      _
    $region29: #{captn_forward.1} parent=1 // pred_fallthru
      _
    // Predicated region
    $region30: #{captn_forward.1} parent=1 // pred_check
      _
    $region31: #{captn_forward.1} parent=1 // pred_check_branch
      %30 = sbr.rel (0) target = $region33
    $region32: #{captn_forward.1} parent=1 // pred_region
      _
    $region33: #{captn_forward.1} parent=1 // pred_fallthru
      _
    // Predicated region
    $region34: #{captn_forward.1} parent=1 // pred_check
      _
    $region35: #{captn_forward.1} parent=1 // pred_check_branch
      %32 = sbr.rel (0) target = $region37
    $region36: #{captn_forward.1} parent=1 // pred_region
      %s34 = ssub.s32 32, 32
      %35 = vsyncadd [#allocation3], %s34
      %s37 = sshll.u32 %s8, 4
      %s38 = int_to_ptr.vmem [resolvable:$true] %s37
      %40 = dma.vmem_to_smem %s38, 32, [#allocation2], [#allocation3]
    $region37: #{captn_forward.1} parent=1 // pred_fallthru
      _
    // Predicated region
    $region38: #{captn_forward.1} parent=1 // pred_check
      _
    $region39: #{captn_forward.1} parent=1 // pred_check_branch
      %42 = sbr.rel (0) target = $region41
    $region40: #{captn_forward.1} parent=1 // pred_region
      %43 = dma.done [#allocation3], 32
    $region41: #{captn_forward.1} parent=1 // pred_fallthru
      _
    %44 = sfence
    %s46 = sld [smem:[#allocation2]]
    %s47 = sld [smem:[#allocation2 + $0x1]]
    %s48 = sld [smem:[#allocation2 + $0x2]]
    %s49 = sld [smem:[#allocation2 + $0x3]]
    %v50 = vld [vmem:[%s2] sm:$0xff]
    %v51 = vld [vmem:[%s2 + $0x8] sm:$0xff]
    %v52 = vld [vmem:[%s2 + $0x10] sm:$0xff]
    %v53 = vld [vmem:[%s2 + $0x18] sm:$0xff]
    %v54 = vld [vmem:[%s2 + $0x20] sm:$0xff]
    %v55 = vld [vmem:[%s2 + $0x28] sm:$0xff]
    %v56 = vld [vmem:[%s2 + $0x30] sm:$0xff]
    %v57 = vld [vmem:[%s2 + $0x38] sm:$0xff]
    %v58 = vld [vmem:[%s2 + $0x40] sm:$0xff]
    %v59 = vld [vmem:[%s2 + $0x48] sm:$0xff]
    %v60 = vld [vmem:[%s2 + $0x50] sm:$0xff]
    %v61 = vld [vmem:[%s2 + $0x58] sm:$0xff]
    %v62 = vld [vmem:[%s2 + $0x60] sm:$0xff]
    %v63 = vld [vmem:[%s2 + $0x68] sm:$0xff]
    %v64 = vld [vmem:[%s2 + $0x70] sm:$0x1]
    %v65 = vld [vmem:[%s0] sm:$0xff]
    %v66 = vld [vmem:[%s0 + $0x8] sm:$0xff]
    %v67 = vld [vmem:[%s0 + $0x10] sm:$0xff]
    %v68 = vld [vmem:[%s0 + $0x18] sm:$0xff]
    %v69 = vld [vmem:[%s3] sm:$0xf]
    %v70 = vld [vmem:[%s3 + $0x4] sm:$0xf]
    %v71 = vld [vmem:[%s3 + $0x8] sm:$0xf]
    %v72 = vld [vmem:[%s3 + $0xc] sm:$0xf]
    %v73 = vld [vmem:[%s3 + $0x10] sm:$0xf]
    %v74 = vld [vmem:[%s3 + $0x14] sm:$0xf]
    %v75 = vld [vmem:[%s3 + $0x18] sm:$0xf]
    %v76 = vld [vmem:[%s3 + $0x1c] sm:$0xf]
    %v77 = vld [vmem:[%s3 + $0x20] sm:$0xf]
    %v78 = vld [vmem:[%s3 + $0x24] sm:$0xf]
    %v79 = vld [vmem:[%s3 + $0x28] sm:$0xf]
    %v80 = vld [vmem:[%s3 + $0x2c] sm:$0xf]
    %v81 = vld [vmem:[%s3 + $0x30] sm:$0xf]
    %v82 = vld [vmem:[%s3 + $0x34] sm:$0xf]
    %v83 = vld [vmem:[%s3 + $0x38] sm:$0xf]
    %v84 = vld [vmem:[%s3 + $0x3c] sm:$0xf]
    %v85 = vld [vmem:[%s3 + $0x40] sm:$0xf]
    %v86 = vld [vmem:[%s3 + $0x44] sm:$0xf]
    %v87 = vld [vmem:[%s3 + $0x48] sm:$0xf]
    %v88 = vld [vmem:[%s3 + $0x4c] sm:$0xf]
    %v89 = vld [vmem:[%s3 + $0x50] sm:$0xf]
    %v90 = vld [vmem:[%s3 + $0x54] sm:$0xf]
    %v91 = vld [vmem:[%s3 + $0x58] sm:$0xf]
    %v92 = vld [vmem:[%s3 + $0x5c] sm:$0xf]
    %v93 = vld [vmem:[%s3 + $0x60] sm:$0xf]
    %v94 = vld [vmem:[%s3 + $0x64] sm:$0xf]
    %v95 = vld [vmem:[%s3 + $0x68] sm:$0xf]
    %v96 = vld [vmem:[%s3 + $0x6c] sm:$0xf]
    %v97 = vld [vmem:[%s3 + $0x70] sm:$0xf]
    %v98 = vld [vmem:[%s3 + $0x74] sm:$0xf]
    %v99 = vld [vmem:[%s3 + $0x78] sm:$0xf]
    %v100 = vld [vmem:[%s3 + $0x7c] sm:$0xf]
    %v101 = vld [vmem:[%s3 + $0x80] sm:$0xf]
    %v102 = vld [vmem:[%s3 + $0x84] sm:$0xf]
    %v103 = vld [vmem:[%s3 + $0x88] sm:$0xf]
    %v104 = vld [vmem:[%s3 + $0x8c] sm:$0xf]
    %v105 = vld [vmem:[%s3 + $0x90] sm:$0xf]
    %v106 = vld [vmem:[%s3 + $0x94] sm:$0xf]
    %v107 = vld [vmem:[%s3 + $0x98] sm:$0xf]
    %v108 = vld [vmem:[%s3 + $0x9c] sm:$0xf]
    %v109 = vld [vmem:[%s3 + $0xa0] sm:$0xf]
    %v110 = vld [vmem:[%s3 + $0xa4] sm:$0xf]
    %v111 = vld [vmem:[%s3 + $0xa8] sm:$0xf]
    %v112 = vld [vmem:[%s3 + $0xac] sm:$0xf]
    %v113 = vld [vmem:[%s3 + $0xb0] sm:$0xf]
    %v114 = vld [vmem:[%s3 + $0xb4] sm:$0xf]
    %v115 = vld [vmem:[%s3 + $0xb8] sm:$0xf]
    %v116 = vld [vmem:[%s3 + $0xbc] sm:$0xf]
    %v117 = vld [vmem:[%s3 + $0xc0] sm:$0xf]
    %v118 = vld [vmem:[%s3 + $0xc4] sm:$0xf]
    %v119 = vld [vmem:[%s3 + $0xc8] sm:$0xf]
    %v120 = vld [vmem:[%s3 + $0xcc] sm:$0xf]
    %v121 = vld [vmem:[%s3 + $0xd0] sm:$0xf]
    %v122 = vld [vmem:[%s3 + $0xd4] sm:$0xf]
    %v123 = vld [vmem:[%s3 + $0xd8] sm:$0xf]
    %v124 = vld [vmem:[%s3 + $0xdc] sm:$0xf]
    %v125 = vld [vmem:[%s3 + $0xe0] sm:$0xf]
    %v126 = vld [vmem:[%s3 + $0xe4] sm:$0xf]
    %v127 = vld [vmem:[%s3 + $0xe8] sm:$0xf]
    %v128 = vld [vmem:[%s3 + $0xec] sm:$0xf]
    %v129 = vld [vmem:[%s3 + $0xf0] sm:$0xf]
    %v130 = vld [vmem:[%s3 + $0xf4] sm:$0xf]
    %v131 = vld [vmem:[%s3 + $0xf8] sm:$0xf]
    %v132 = vld [vmem:[%s3 + $0xfc] sm:$0xf]
    %v137 = vunpack.c.l.b16 %v65
    %v138 = vunpack.c.h.b16 %v65
    %v139 = vunpack.c.l.b16 %v66
    %v140 = vunpack.c.h.b16 %v66
    %v141 = vunpack.c.l.b16 %v67
    %v142 = vunpack.c.h.b16 %v67
    %v143 = vunpack.c.l.b16 %v68
    %v144 = vunpack.c.h.b16 %v68
    %v145 = vpack.c.b16 %v141, %v137
    %v146 = vpack.c.b16 %v142, %v138
    %v147 = vpack.c.b16 %v143, %v139
    %v148 = vpack.c.b16 %v144, %v140
    %v217 = vunpack.c.l.b16 %v69
    %v218 = vunpack.c.l.b16 %v70
    %v219 = vunpack.c.l.b16 %v71
    %v220 = vunpack.c.l.b16 %v72
    %v221 = vunpack.c.l.b16 %v73
    %v222 = vunpack.c.l.b16 %v74
    %v223 = vunpack.c.l.b16 %v75
    %v224 = vunpack.c.l.b16 %v76
    %v225 = vunpack.c.l.b16 %v77
    %v226 = vunpack.c.l.b16 %v78
    %v227 = vunpack.c.l.b16 %v79
    %v228 = vunpack.c.l.b16 %v80
    %v229 = vunpack.c.l.b16 %v81
    %v230 = vunpack.c.l.b16 %v82
    %v231 = vunpack.c.l.b16 %v83
    %v232 = vunpack.c.l.b16 %v84
    %v233 = vunpack.c.l.b16 %v85
    %v234 = vunpack.c.l.b16 %v86
    %v235 = vunpack.c.l.b16 %v87
    %v236 = vunpack.c.l.b16 %v88
    %v237 = vunpack.c.l.b16 %v89
    %v238 = vunpack.c.l.b16 %v90
    %v239 = vunpack.c.l.b16 %v91
    %v240 = vunpack.c.l.b16 %v92
    %v241 = vunpack.c.l.b16 %v93
    %v242 = vunpack.c.l.b16 %v94
    %v243 = vunpack.c.l.b16 %v95
    %v244 = vunpack.c.l.b16 %v96
    %v245 = vunpack.c.l.b16 %v97
    %v246 = vunpack.c.l.b16 %v98
    %v247 = vunpack.c.l.b16 %v99
    %v248 = vunpack.c.l.b16 %v100
    %v249 = vunpack.c.l.b16 %v101
    %v250 = vunpack.c.l.b16 %v102
    %v251 = vunpack.c.l.b16 %v103
    %v252 = vunpack.c.l.b16 %v104
    %v253 = vunpack.c.l.b16 %v105
    %v254 = vunpack.c.l.b16 %v106
    %v255 = vunpack.c.l.b16 %v107
    %v256 = vunpack.c.l.b16 %v108
    %v257 = vunpack.c.l.b16 %v109
    %v258 = vunpack.c.l.b16 %v110
    %v259 = vunpack.c.l.b16 %v111
    %v260 = vunpack.c.l.b16 %v112
    %v261 = vunpack.c.l.b16 %v113
    %v262 = vunpack.c.l.b16 %v114
    %v263 = vunpack.c.l.b16 %v115
    %v264 = vunpack.c.l.b16 %v116
    %v265 = vunpack.c.l.b16 %v117
    %v266 = vunpack.c.l.b16 %v118
    %v267 = vunpack.c.l.b16 %v119
    %v268 = vunpack.c.l.b16 %v120
    %v269 = vunpack.c.l.b16 %v121
    %v270 = vunpack.c.l.b16 %v122
    %v271 = vunpack.c.l.b16 %v123
    %v272 = vunpack.c.l.b16 %v124
    %v273 = vunpack.c.l.b16 %v125
    %v274 = vunpack.c.l.b16 %v126
    %v275 = vunpack.c.l.b16 %v127
    %v276 = vunpack.c.l.b16 %v128
    %v277 = vunpack.c.l.b16 %v129
    %v278 = vunpack.c.l.b16 %v130
    %v279 = vunpack.c.l.b16 %v131
    %v280 = vunpack.c.l.b16 %v132
    %v281 = vpack.c.b16 %v218, %v217
    %v282 = vpack.c.b16 %v220, %v219
    %v283 = vpack.c.b16 %v222, %v221
    %v284 = vpack.c.b16 %v224, %v223
    %v285 = vpack.c.b16 %v226, %v225
    %v286 = vpack.c.b16 %v228, %v227
    %v287 = vpack.c.b16 %v230, %v229
    %v288 = vpack.c.b16 %v232, %v231
    %v289 = vpack.c.b16 %v234, %v233
    %v290 = vpack.c.b16 %v236, %v235
    %v291 = vpack.c.b16 %v238, %v237
    %v292 = vpack.c.b16 %v240, %v239
    %v293 = vpack.c.b16 %v242, %v241
    %v294 = vpack.c.b16 %v244, %v243
    %v295 = vpack.c.b16 %v246, %v245
    %v296 = vpack.c.b16 %v248, %v247
    %v297 = vpack.c.b16 %v250, %v249
    %v298 = vpack.c.b16 %v252, %v251
    %v299 = vpack.c.b16 %v254, %v253
    %v300 = vpack.c.b16 %v256, %v255
    %v301 = vpack.c.b16 %v258, %v257
    %v302 = vpack.c.b16 %v260, %v259
    %v303 = vpack.c.b16 %v262, %v261
    %v304 = vpack.c.b16 %v264, %v263
    %v305 = vpack.c.b16 %v266, %v265
    %v306 = vpack.c.b16 %v268, %v267
    %v307 = vpack.c.b16 %v270, %v269
    %v308 = vpack.c.b16 %v272, %v271
    %v309 = vpack.c.b16 %v274, %v273
    %v310 = vpack.c.b16 %v276, %v275
    %v311 = vpack.c.b16 %v278, %v277
    %v312 = vpack.c.b16 %v280, %v279
    %345 = vmatprep.subr.bf16.mxu0 0
    %346 = vmatpush1.bf16.msra.mxu0 %v288
    %347 = vmatprep.subr.bf16.mxu0 0
    %348 = vmatpush1.bf16.msra.mxu0 %v287
    %349 = vmatprep.subr.bf16.mxu0 0
    %350 = vmatpush1.bf16.msra.mxu0 %v286
    %351 = vmatprep.subr.bf16.mxu0 0
    %352 = vmatpush1.bf16.msra.mxu0 %v285
    %353 = vmatprep.subr.bf16.mxu0 0
    %354 = vmatpush1.bf16.msra.mxu0 %v284
    %355 = vmatprep.subr.bf16.mxu0 0
    %356 = vmatpush1.bf16.msra.mxu0 %v283
    %357 = vmatprep.subr.bf16.mxu0 0
    %358 = vmatpush1.bf16.msra.mxu0 %v282
    %359 = vmatprep.subr.bf16.mxu0 0
    %360 = vmatpush1.bf16.msra.mxu0 %v281
    %361 = vmatprep.subr.bf16.mxu0 0
    %362 = vmatpush2.bf16.msra.mxu0 %v296
    %363 = vmatprep.subr.bf16.mxu0 0
    %364 = vmatpush2.bf16.msra.mxu0 %v295
    %365 = vmatprep.subr.bf16.mxu0 0
    %366 = vmatpush2.bf16.msra.mxu0 %v294
    %367 = vmatprep.subr.bf16.mxu0 0
    %368 = vmatpush2.bf16.msra.mxu0 %v293
    %369 = vmatprep.subr.bf16.mxu0 0
    %370 = vmatpush2.bf16.msra.mxu0 %v292
    %371 = vmatprep.subr.bf16.mxu0 0
    %372 = vmatpush2.bf16.msra.mxu0 %v291
    %373 = vmatprep.subr.bf16.mxu0 0
    %374 = vmatpush2.bf16.msra.mxu0 %v290
    %375 = vmatprep.subr.bf16.mxu0 0
    %376 = vmatpush2.bf16.msra.mxu0 %v289
    %377 = vmatprep.mubr.bf16.mxu0 %v146
    %378 = vmatmul.mubr.bf16.gmra.mxu0 %v145
    %v379 = vpop.f32.mrf.mxu0
    %v380 = vadd.f32 0.0, %v379
    %v381 = vpop.f32.mrf.mxu0
    %v382 = vpop.f32.mrf.mxu0
    %v383 = vadd.f32 0.0, %v382
    %v384 = vpop.f32.mrf.mxu0
    %385 = vdwg.mxu0
    %386 = vmatprep.subr.bf16.mxu0 0
    %387 = vmatpush1.bf16.msra.mxu0 %v304
    %388 = vmatprep.subr.bf16.mxu0 0
    %389 = vmatpush1.bf16.msra.mxu0 %v303
    %390 = vmatprep.subr.bf16.mxu0 0
    %391 = vmatpush1.bf16.msra.mxu0 %v302
    %392 = vmatprep.subr.bf16.mxu0 0
    %393 = vmatpush1.bf16.msra.mxu0 %v301
    %394 = vmatprep.subr.bf16.mxu0 0
    %395 = vmatpush1.bf16.msra.mxu0 %v300
    %396 = vmatprep.subr.bf16.mxu0 0
    %397 = vmatpush1.bf16.msra.mxu0 %v299
    %398 = vmatprep.subr.bf16.mxu0 0
    %399 = vmatpush1.bf16.msra.mxu0 %v298
    %400 = vmatprep.subr.bf16.mxu0 0
    %401 = vmatpush1.bf16.msra.mxu0 %v297
    %402 = vmatprep.subr.bf16.mxu0 0
    %403 = vmatpush2.bf16.msra.mxu0 %v312
    %404 = vmatprep.subr.bf16.mxu0 0
    %405 = vmatpush2.bf16.msra.mxu0 %v311
    %406 = vmatprep.subr.bf16.mxu0 0
    %407 = vmatpush2.bf16.msra.mxu0 %v310
    %408 = vmatprep.subr.bf16.mxu0 0
    %409 = vmatpush2.bf16.msra.mxu0 %v309
    %410 = vmatprep.subr.bf16.mxu0 0
    %411 = vmatpush2.bf16.msra.mxu0 %v308
    %412 = vmatprep.subr.bf16.mxu0 0
    %413 = vmatpush2.bf16.msra.mxu0 %v307
    %414 = vmatprep.subr.bf16.mxu0 0
    %415 = vmatpush2.bf16.msra.mxu0 %v306
    %416 = vmatprep.subr.bf16.mxu0 0
    %417 = vmatpush2.bf16.msra.mxu0 %v305
    %418 = vmatprep.mubr.bf16.mxu0 %v148
    %419 = vmatmul.mubr.bf16.gmra.mxu0 %v147
    %v420 = vpop.f32.mrf.mxu0
    %v421 = vadd.f32 %v380, %v420
    %v422 = vpop.f32.mrf.mxu0
    %v423 = vpop.f32.mrf.mxu0
    %v424 = vadd.f32 %v383, %v423
    %v425 = vpop.f32.mrf.mxu0
    %426 = vdwg.mxu0
    %428 = vset.pattern.permute.xlu0 0
    %429 = vperm.xlu0 %428, %v54
    %v430 = vpop.permute.xlu0 %429
    %433 = vset.pattern.permute.xlu0 0
    %434 = vperm.xlu0 %433, %v55
    %v435 = vpop.permute.xlu0 %434
    %v437 = vmul.f32 %v421, %v430
    %v438 = vmul.f32 %v424, %v435
    %440 = vset.pattern.permute.xlu0 0
    %441 = vperm.xlu0 %440, %v56
    %v442 = vpop.permute.xlu0 %441
    %445 = vset.pattern.permute.xlu0 0
    %446 = vperm.xlu0 %445, %v57
    %v447 = vpop.permute.xlu0 %446
    %v449 = vadd.f32 %v437, %v442
    %v450 = vadd.f32 %v438, %v447
    %vm451 = vcmask 15360
    %452 = vst.msk [vmem:[%s9] sm:$0xff] %vm451, %v449
    %453 = vst.msk [vmem:[%s9 + $0x8] sm:$0xff] %vm451, %v450
    %v454 = vld [vmem:[%s1] sm:$0xf]
    %v455 = vld [vmem:[%s1 + $0x4] sm:$0xf]
    %v456 = vld [vmem:[%s1 + $0x8] sm:$0xf]
    %v457 = vld [vmem:[%s1 + $0xc] sm:$0xf]
    %v458 = vld [vmem:[%s1 + $0x10] sm:$0xf]
    %v459 = vld [vmem:[%s1 + $0x14] sm:$0xf]
    %v460 = vld [vmem:[%s1 + $0x18] sm:$0x1]
    %462 = vset.pattern.permute.xlu0 0
    %463 = vperm.xlu0 %462, %v58
    %v464 = vpop.permute.xlu0 %463
    %467 = vset.pattern.permute.xlu0 0
    %468 = vperm.xlu0 %467, %v59
    %v469 = vpop.permute.xlu0 %468
    %472 = vset.pattern.permute.xlu0 0
    %473 = vperm.xlu0 %472, %v60
    %v474 = vpop.permute.xlu0 %473
    %477 = vset.pattern.permute.xlu0 0
    %478 = vperm.xlu0 %477, %v61
    %v479 = vpop.permute.xlu0 %478
    %482 = vset.pattern.permute.xlu0 0
    %483 = vperm.xlu0 %482, %v62
    %v484 = vpop.permute.xlu0 %483
    %487 = vset.pattern.permute.xlu0 0
    %488 = vperm.xlu0 %487, %v63
    %v489 = vpop.permute.xlu0 %488
    %492 = vset.pattern.permute.xlu0 0
    %493 = vperm.xlu0 %492, %v64
    %v494 = vpop.permute.xlu0 %493
    %v503 = vunpack.c.l.b16 %v454
    %v504 = vunpack.c.l.b16 %v455
    %v505 = vunpack.c.l.b16 %v456
    %v506 = vunpack.c.l.b16 %v457
    %v507 = vunpack.c.l.b16 %v458
    %v508 = vunpack.c.l.b16 %v459
    %v509 = vunpack.c.l.b16 %v460
    %v510 = vpack.c.b16 %v504, %v503
    %v511 = vpack.c.b16 %v506, %v505
    %v512 = vpack.c.b16 %v508, %v507
    %v513 = vpack.c.b16 %v509, %v509
    %vm514 = vcmask 130048
    %v516 = vsel %vm514, %v510, 0
    %v519 = vsel %vm514, %v511, 0
    %v522 = vsel %vm514, %v512, 0
    %v525 = vsel %vm514, %v513, 0
    %527 = vmatprep.subr.bf16.mxu0 0
    %528 = vmatpush1.bf16.msra.mxu0 0
    %529 = vmatprep.subr.bf16.mxu0 0
    %530 = vmatpush1.bf16.msra.mxu0 0
    %531 = vmatprep.subr.bf16.mxu0 0
    %532 = vmatpush1.bf16.msra.mxu0 0
    %533 = vmatprep.subr.bf16.mxu0 0
    %534 = vmatpush1.bf16.msra.mxu0 0
    %535 = vmatprep.subr.bf16.mxu0 0
    %536 = vmatpush1.bf16.msra.mxu0 0
    %537 = vmatprep.subr.bf16.mxu0 0
    %538 = vmatpush1.bf16.msra.mxu0 0
    %539 = vmatprep.subr.bf16.mxu0 0
    %540 = vmatpush1.bf16.msra.mxu0 0
    %541 = vmatprep.subr.bf16.mxu0 %v146
    %542 = vmatpush1.bf16.msra.mxu0 %v145
    %543 = vmatprep.subr.bf16.mxu0 0
    %544 = vmatpush2.bf16.msra.mxu0 0
    %545 = vmatprep.subr.bf16.mxu0 0
    %546 = vmatpush2.bf16.msra.mxu0 0
    %547 = vmatprep.subr.bf16.mxu0 0
    %548 = vmatpush2.bf16.msra.mxu0 0
    %549 = vmatprep.subr.bf16.mxu0 0
    %550 = vmatpush2.bf16.msra.mxu0 0
    %551 = vmatprep.subr.bf16.mxu0 0
    %552 = vmatpush2.bf16.msra.mxu0 0
    %553 = vmatprep.subr.bf16.mxu0 0
    %554 = vmatpush2.bf16.msra.mxu0 0
    %555 = vmatprep.subr.bf16.mxu0 0
    %556 = vmatpush2.bf16.msra.mxu0 0
    %557 = vmatprep.subr.bf16.mxu0 0
    %558 = vmatpush2.bf16.msra.mxu0 0
    %559 = vmatprep.mubr.bf16.mxu0 0
    %560 = vmatmul.mubr.bf16.gmra.mxu0 %v516
    %v561 = vpop.f32.mrf.mxu0
    %v562 = vadd.f32 %v464, %v561
    %v563 = vpop.f32.mrf.mxu0
    %v564 = vadd.f32 %v464, %v563
    %v565 = vpop.f32.mrf.mxu0
    %v566 = vadd.f32 %v469, %v565
    %v567 = vpop.f32.mrf.mxu0
    %v568 = vadd.f32 %v469, %v567
    %569 = vmatprep.mubr.bf16.mxu0 0
    %570 = vmatmul.mubr.bf16.gmra.mxu0 %v519
    %v571 = vpop.f32.mrf.mxu0
    %v572 = vadd.f32 %v474, %v571
    %v573 = vpop.f32.mrf.mxu0
    %v574 = vadd.f32 %v474, %v573
    %v575 = vpop.f32.mrf.mxu0
    %v576 = vadd.f32 %v479, %v575
    %v577 = vpop.f32.mrf.mxu0
    %v578 = vadd.f32 %v479, %v577
    %579 = vmatprep.mubr.bf16.mxu0 0
    %580 = vmatmul.mubr.bf16.gmra.mxu0 %v522
    %v581 = vpop.f32.mrf.mxu0
    %v582 = vadd.f32 %v484, %v581
    %v583 = vpop.f32.mrf.mxu0
    %v584 = vadd.f32 %v484, %v583
    %v585 = vpop.f32.mrf.mxu0
    %v586 = vadd.f32 %v489, %v585
    %v587 = vpop.f32.mrf.mxu0
    %v588 = vadd.f32 %v489, %v587
    %589 = vmatprep.mubr.bf16.mxu0 0
    %590 = vmatmul.mubr.bf16.gmra.mxu0 %v525
    %v591 = vpop.f32.mrf.mxu0
    %v592 = vadd.f32 %v494, %v591
    %v593 = vpop.f32.mrf.mxu0
    %v594 = vadd.f32 %v494, %v593
    %v595 = vpop.f32.mrf.mxu0
    %v596 = vpop.f32.mrf.mxu0
    %597 = vdwg.mxu0
    %598 = vmatprep.subr.bf16.mxu0 0
    %599 = vmatpush1.bf16.msra.mxu0 0
    %600 = vmatprep.subr.bf16.mxu0 0
    %601 = vmatpush1.bf16.msra.mxu0 0
    %602 = vmatprep.subr.bf16.mxu0 0
    %603 = vmatpush1.bf16.msra.mxu0 0
    %604 = vmatprep.subr.bf16.mxu0 0
    %605 = vmatpush1.bf16.msra.mxu0 0
    %606 = vmatprep.subr.bf16.mxu0 0
    %607 = vmatpush1.bf16.msra.mxu0 0
    %608 = vmatprep.subr.bf16.mxu0 0
    %609 = vmatpush1.bf16.msra.mxu0 0
    %610 = vmatprep.subr.bf16.mxu0 0
    %611 = vmatpush1.bf16.msra.mxu0 0
    %612 = vmatprep.subr.bf16.mxu0 %v148
    %613 = vmatpush1.bf16.msra.mxu0 %v147
    %614 = vmatprep.subr.bf16.mxu0 0
    %615 = vmatpush2.bf16.msra.mxu0 0
    %616 = vmatprep.subr.bf16.mxu0 0
    %617 = vmatpush2.bf16.msra.mxu0 0
    %618 = vmatprep.subr.bf16.mxu0 0
    %619 = vmatpush2.bf16.msra.mxu0 0
    %620 = vmatprep.subr.bf16.mxu0 0
    %621 = vmatpush2.bf16.msra.mxu0 0
    %622 = vmatprep.subr.bf16.mxu0 0
    %623 = vmatpush2.bf16.msra.mxu0 0
    %624 = vmatprep.subr.bf16.mxu0 0
    %625 = vmatpush2.bf16.msra.mxu0 0
    %626 = vmatprep.subr.bf16.mxu0 0
    %627 = vmatpush2.bf16.msra.mxu0 0
    %628 = vmatprep.subr.bf16.mxu0 0
    %629 = vmatpush2.bf16.msra.mxu0 0
    %630 = vmatprep.mubr.bf16.mxu0 0
    %631 = vmatmul.mubr.bf16.gmra.mxu0 %v516
    %v632 = vpop.f32.mrf.mxu0
    %v633 = vadd.f32 %v464, %v632
    %v634 = vpop.f32.mrf.mxu0
    %v635 = vadd.f32 %v464, %v634
    %v636 = vpop.f32.mrf.mxu0
    %v637 = vadd.f32 %v469, %v636
    %v638 = vpop.f32.mrf.mxu0
    %v639 = vadd.f32 %v469, %v638
    %640 = vmatprep.mubr.bf16.mxu0 0
    %641 = vmatmul.mubr.bf16.gmra.mxu0 %v519
    %v642 = vpop.f32.mrf.mxu0
    %v643 = vadd.f32 %v474, %v642
    %v644 = vpop.f32.mrf.mxu0
    %v645 = vadd.f32 %v474, %v644
    %v646 = vpop.f32.mrf.mxu0
    %v647 = vadd.f32 %v479, %v646
    %v648 = vpop.f32.mrf.mxu0
    %v649 = vadd.f32 %v479, %v648
    %650 = vmatprep.mubr.bf16.mxu0 0
    %651 = vmatmul.mubr.bf16.gmra.mxu0 %v522
    %v652 = vpop.f32.mrf.mxu0
    %v653 = vadd.f32 %v484, %v652
    %v654 = vpop.f32.mrf.mxu0
    %v655 = vadd.f32 %v484, %v654
    %v656 = vpop.f32.mrf.mxu0
    %v657 = vadd.f32 %v489, %v656
    %v658 = vpop.f32.mrf.mxu0
    %v659 = vadd.f32 %v489, %v658
    %660 = vmatprep.mubr.bf16.mxu0 0
    %661 = vmatmul.mubr.bf16.gmra.mxu0 %v525
    %v662 = vpop.f32.mrf.mxu0
    %v663 = vadd.f32 %v494, %v662
    %v664 = vpop.f32.mrf.mxu0
    %v665 = vadd.f32 %v494, %v664
    %v666 = vpop.f32.mrf.mxu0
    %v667 = vpop.f32.mrf.mxu0
    %668 = vdwg.mxu0
    %v669 = vmax.f32 %v562, %v566
    %v670 = vrot.slane %v669, 4
    %v671 = vmax.f32 %v669, %v670
    %v672 = vrot.slane %v671, 2
    %v673 = vmax.f32 %v671, %v672
    %v674 = vrot.slane %v673, 1
    %v675 = vmax.f32 %v673, %v674
    %v676 = vmax.f32 %v564, %v568
    %v677 = vrot.slane %v676, 4
    %v678 = vmax.f32 %v676, %v677
    %v679 = vrot.slane %v678, 2
    %v680 = vmax.f32 %v678, %v679
    %v681 = vrot.slane %v680, 1
    %v682 = vmax.f32 %v680, %v681
    %v683 = vmax.f32 %v633, %v637
    %v684 = vrot.slane %v683, 4
    %v685 = vmax.f32 %v683, %v684
    %v686 = vrot.slane %v685, 2
    %v687 = vmax.f32 %v685, %v686
    %v688 = vrot.slane %v687, 1
    %v689 = vmax.f32 %v687, %v688
    %v690 = vmax.f32 %v635, %v639
    %v691 = vrot.slane %v690, 4
    %v692 = vmax.f32 %v690, %v691
    %v693 = vrot.slane %v692, 2
    %v694 = vmax.f32 %v692, %v693
    %v695 = vrot.slane %v694, 1
    %v696 = vmax.f32 %v694, %v695
    %v697 = vstv %s46
    %v698 = vmul.f32 %v697, %v592
    %v699 = vmul.f32 %v697, %v594
    %v700 = vmul.f32 %v697, %v663
    %v701 = vmul.f32 %v697, %v665
    %v702 = vstv %s47
    %v703 = vmul.f32 %v702, %v675
    %v704 = vmul.f32 %v702, %v682
    %v705 = vmul.f32 %v702, %v689
    %v706 = vmul.f32 %v702, %v696
    %v707 = vadd.f32 %v698, %v703
    %v708 = vadd.f32 %v699, %v704
    %v709 = vadd.f32 %v700, %v705
    %v710 = vadd.f32 %v701, %v706
    %v711 = vxor.u32 %v707, 2147483648
    %v712 = vxor.u32 %v708, 2147483648
    %v713 = vxor.u32 %v709, 2147483648
    %v714 = vxor.u32 %v710, 2147483648
    %v715 = vmul.f32 %v711, 1.442695
    %v716 = vpow.pop %v715
    %v717 = vmul.f32 %v712, 1.442695
    %v718 = vpow.pop %v717
    %v719 = vmul.f32 %v713, 1.442695
    %v720 = vpow.pop %v719
    %v721 = vmul.f32 %v714, 1.442695
    %v722 = vpow.pop %v721
    %v723 = vadd.f32 %v716, 1.0
    %v724 = vadd.f32 %v718, 1.0
    %v725 = vadd.f32 %v720, 1.0
    %v726 = vadd.f32 %v722, 1.0
    %v727 = vrcp.pop %v723
    %v728 = vmul.f32 1.0, %v727
    %v729 = vrcp.pop %v724
    %v730 = vmul.f32 1.0, %v729
    %v731 = vrcp.pop %v725
    %v732 = vmul.f32 1.0, %v731
    %v733 = vrcp.pop %v726
    %v734 = vmul.f32 1.0, %v733
    %v735 = vlaneseq
    %v736 = vshrl.u32 %v735, 7
    %v737 = vsub.s32 0, %v736
    %v738 = vrot.slane %v728, %v737
    %v739 = vlaneseq
    %v740 = vshrl.u32 %v739, 7
    %v741 = vsub.s32 0, %v740
    %v742 = vrot.slane %v730, %v741
    %v743 = vlaneseq
    %v744 = vshrl.u32 %v743, 7
    %v745 = vsub.s32 0, %v744
    %v746 = vrot.slane %v732, %v745
    %v747 = vlaneseq
    %v748 = vshrl.u32 %v747, 7
    %v749 = vsub.s32 0, %v748
    %v750 = vrot.slane %v734, %v749
    %v751 = vmul.f32 %v562, %v738
    %v752 = vmul.f32 %v564, %v742
    %v753 = vmul.f32 %v633, %v746
    %v754 = vmul.f32 %v635, %v750
    %v755 = vmul.f32 %v566, %v738
    %v756 = vmul.f32 %v568, %v742
    %v757 = vmul.f32 %v637, %v746
    %v758 = vmul.f32 %v639, %v750
    %v759 = vadd.f32 %v751, %v562
    %v760 = vadd.f32 %v752, %v564
    %v761 = vadd.f32 %v753, %v633
    %v762 = vadd.f32 %v754, %v635
    %v763 = vadd.f32 %v755, %v566
    %v764 = vadd.f32 %v756, %v568
    %v765 = vadd.f32 %v757, %v637
    %v766 = vadd.f32 %v758, %v639
    %768 = vset.pattern.permute.xlu0 0
    %769 = vperm.xlu0 %768, %v50
    %v770 = vpop.permute.xlu0 %769
    %773 = vset.pattern.permute.xlu0 0
    %774 = vperm.xlu0 %773, %v51
    %v775 = vpop.permute.xlu0 %774
    %v777 = vmul.f32 %v759, %v770
    %v778 = vmul.f32 %v760, %v770
    %v779 = vmul.f32 %v761, %v770
    %v780 = vmul.f32 %v762, %v770
    %v781 = vmul.f32 %v763, %v775
    %v782 = vmul.f32 %v764, %v775
    %v783 = vmul.f32 %v765, %v775
    %v784 = vmul.f32 %v766, %v775
    %786 = vset.pattern.permute.xlu0 0
    %787 = vperm.xlu0 %786, %v52
    %v788 = vpop.permute.xlu0 %787
    %791 = vset.pattern.permute.xlu0 0
    %792 = vperm.xlu0 %791, %v53
    %v793 = vpop.permute.xlu0 %792
    %v795 = vadd.f32 %v777, %v788
    %v796 = vadd.f32 %v778, %v788
    %v797 = vadd.f32 %v779, %v788
    %v798 = vadd.f32 %v780, %v788
    %v799 = vadd.f32 %v781, %v793
    %v800 = vadd.f32 %v782, %v793
    %v801 = vadd.f32 %v783, %v793
    %v802 = vadd.f32 %v784, %v793
    %v803 = vmul.f32 %v795, 0.5
    %v804 = vmul.f32 %v796, 0.5
    %v805 = vmul.f32 %v797, 0.5
    %v806 = vmul.f32 %v798, 0.5
    %v807 = vmul.f32 %v799, 0.5
    %v808 = vmul.f32 %v800, 0.5
    %v809 = vmul.f32 %v801, 0.5
    %v810 = vmul.f32 %v802, 0.5
    %v811 = vmul.f32 %v795, 0.70710677
    %v812 = vmul.f32 %v796, 0.70710677
    %v813 = vmul.f32 %v797, 0.70710677
    %v814 = vmul.f32 %v798, 0.70710677
    %v815 = vmul.f32 %v799, 0.70710677
    %v816 = vmul.f32 %v800, 0.70710677
    %v817 = vmul.f32 %v801, 0.70710677
    %v818 = vmul.f32 %v802, 0.70710677
    %v819 = verf.f32.pop %v811
    %v820 = verf.f32.pop %v812
    %v821 = verf.f32.pop %v813
    %v822 = verf.f32.pop %v814
    %v823 = verf.f32.pop %v815
    %v824 = verf.f32.pop %v816
    %v825 = verf.f32.pop %v817
    %v826 = verf.f32.pop %v818
    %v827 = vadd.f32 %v819, 1.0
    %v828 = vadd.f32 %v820, 1.0
    %v829 = vadd.f32 %v821, 1.0
    %v830 = vadd.f32 %v822, 1.0
    %v831 = vadd.f32 %v823, 1.0
    %v832 = vadd.f32 %v824, 1.0
    %v833 = vadd.f32 %v825, 1.0
    %v834 = vadd.f32 %v826, 1.0
    %v835 = vmul.f32 %v803, %v827
    %v836 = vmul.f32 %v804, %v828
    %v837 = vmul.f32 %v805, %v829
    %v838 = vmul.f32 %v806, %v830
    %v839 = vmul.f32 %v807, %v831
    %v840 = vmul.f32 %v808, %v832
    %v841 = vmul.f32 %v809, %v833
    %v842 = vmul.f32 %v810, %v834
    %v843 = vstv %s48
    %v844 = vmul.f32 %v843, %v835
    %v845 = vmul.f32 %v843, %v836
    %v846 = vmul.f32 %v843, %v837
    %v847 = vmul.f32 %v843, %v838
    %v848 = vmul.f32 %v843, %v839
    %v849 = vmul.f32 %v843, %v840
    %v850 = vmul.f32 %v843, %v841
    %v851 = vmul.f32 %v843, %v842
    %v852 = vmul.f32 %v572, 0.5
    %v853 = vmul.f32 %v574, 0.5
    %v854 = vmul.f32 %v643, 0.5
    %v855 = vmul.f32 %v645, 0.5
    %v856 = vmul.f32 %v576, 0.5
    %v857 = vmul.f32 %v578, 0.5
    %v858 = vmul.f32 %v647, 0.5
    %v859 = vmul.f32 %v649, 0.5
    %v860 = vmul.f32 %v572, 0.70710677
    %v861 = vmul.f32 %v574, 0.70710677
    %v862 = vmul.f32 %v643, 0.70710677
    %v863 = vmul.f32 %v645, 0.70710677
    %v864 = vmul.f32 %v576, 0.70710677
    %v865 = vmul.f32 %v578, 0.70710677
    %v866 = vmul.f32 %v647, 0.70710677
    %v867 = vmul.f32 %v649, 0.70710677
    %v868 = verf.f32.pop %v860
    %v869 = verf.f32.pop %v861
    %v870 = verf.f32.pop %v862
    %v871 = verf.f32.pop %v863
    %v872 = verf.f32.pop %v864
    %v873 = verf.f32.pop %v865
    %v874 = verf.f32.pop %v866
    %v875 = verf.f32.pop %v867
    %v876 = vadd.f32 %v868, 1.0
    %v877 = vadd.f32 %v869, 1.0
    %v878 = vadd.f32 %v870, 1.0
    %v879 = vadd.f32 %v871, 1.0
    %v880 = vadd.f32 %v872, 1.0
    %v881 = vadd.f32 %v873, 1.0
    %v882 = vadd.f32 %v874, 1.0
    %v883 = vadd.f32 %v875, 1.0
    %v884 = vmul.f32 %v852, %v876
    %v885 = vmul.f32 %v853, %v877
    %v886 = vmul.f32 %v854, %v878
    %v887 = vmul.f32 %v855, %v879
    %v888 = vmul.f32 %v856, %v880
    %v889 = vmul.f32 %v857, %v881
    %v890 = vmul.f32 %v858, %v882
    %v891 = vmul.f32 %v859, %v883
    %v892 = vstv %s49
    %v893 = vmul.f32 %v892, %v884
    %v894 = vmul.f32 %v892, %v885
    %v895 = vmul.f32 %v892, %v886
    %v896 = vmul.f32 %v892, %v887
    %v897 = vmul.f32 %v892, %v888
    %v898 = vmul.f32 %v892, %v889
    %v899 = vmul.f32 %v892, %v890
    %v900 = vmul.f32 %v892, %v891
    %v901 = vadd.f32 %v844, %v893
    %v902 = vadd.f32 %v845, %v894
    %v903 = vadd.f32 %v846, %v895
    %v904 = vadd.f32 %v847, %v896
    %v905 = vadd.f32 %v848, %v897
    %v906 = vadd.f32 %v849, %v898
    %v907 = vadd.f32 %v850, %v899
    %v908 = vadd.f32 %v851, %v900
    %v909 = vmul.f32 %v582, 0.5
    %v910 = vmul.f32 %v584, 0.5
    %v911 = vmul.f32 %v653, 0.5
    %v912 = vmul.f32 %v655, 0.5
    %v913 = vmul.f32 %v586, 0.5
    %v914 = vmul.f32 %v588, 0.5
    %v915 = vmul.f32 %v657, 0.5
    %v916 = vmul.f32 %v659, 0.5
    %v917 = vmul.f32 %v582, 0.70710677
    %v918 = vmul.f32 %v584, 0.70710677
    %v919 = vmul.f32 %v653, 0.70710677
    %v920 = vmul.f32 %v655, 0.70710677
    %v921 = vmul.f32 %v586, 0.70710677
    %v922 = vmul.f32 %v588, 0.70710677
    %v923 = vmul.f32 %v657, 0.70710677
    %v924 = vmul.f32 %v659, 0.70710677
    %v925 = verf.f32.pop %v917
    %v926 = verf.f32.pop %v918
    %v927 = verf.f32.pop %v919
    %v928 = verf.f32.pop %v920
    %v929 = verf.f32.pop %v921
    %v930 = verf.f32.pop %v922
    %v931 = verf.f32.pop %v923
    %v932 = verf.f32.pop %v924
    %v933 = vadd.f32 %v925, 1.0
    %v934 = vadd.f32 %v926, 1.0
    %v935 = vadd.f32 %v927, 1.0
    %v936 = vadd.f32 %v928, 1.0
    %v937 = vadd.f32 %v929, 1.0
    %v938 = vadd.f32 %v930, 1.0
    %v939 = vadd.f32 %v931, 1.0
    %v940 = vadd.f32 %v932, 1.0
    %v941 = vmul.f32 %v909, %v933
    %v942 = vmul.f32 %v910, %v934
    %v943 = vmul.f32 %v911, %v935
    %v944 = vmul.f32 %v912, %v936
    %v945 = vmul.f32 %v913, %v937
    %v946 = vmul.f32 %v914, %v938
    %v947 = vmul.f32 %v915, %v939
    %v948 = vmul.f32 %v916, %v940
    %v949 = vmul.f32 %v892, %v941
    %v950 = vmul.f32 %v892, %v942
    %v951 = vmul.f32 %v892, %v943
    %v952 = vmul.f32 %v892, %v944
    %v953 = vmul.f32 %v892, %v945
    %v954 = vmul.f32 %v892, %v946
    %v955 = vmul.f32 %v892, %v947
    %v956 = vmul.f32 %v892, %v948
    %v957 = vadd.f32 %v901, %v949
    %v958 = vadd.f32 %v902, %v950
    %v959 = vadd.f32 %v903, %v951
    %v960 = vadd.f32 %v904, %v952
    %v961 = vadd.f32 %v905, %v953
    %v962 = vadd.f32 %v906, %v954
    %v963 = vadd.f32 %v907, %v955
    %v964 = vadd.f32 %v908, %v956
    %v965 = vpack.c.bf16 %v961, %v957
    %v966 = vpack.c.bf16 %v962, %v958
    %v967 = vpack.c.bf16 %v963, %v959
    %v968 = vpack.c.bf16 %v964, %v960
    %969 = vmatprep.subr.bf16.mxu0 0
    %970 = vmatpush1.bf16.msra.mxu0 %v288
    %971 = vmatprep.subr.bf16.mxu0 0
    %972 = vmatpush1.bf16.msra.mxu0 %v287
    %973 = vmatprep.subr.bf16.mxu0 0
    %974 = vmatpush1.bf16.msra.mxu0 %v286
    %975 = vmatprep.subr.bf16.mxu0 0
    %976 = vmatpush1.bf16.msra.mxu0 %v285
    %977 = vmatprep.subr.bf16.mxu0 0
    %978 = vmatpush1.bf16.msra.mxu0 %v284
    %979 = vmatprep.subr.bf16.mxu0 0
    %980 = vmatpush1.bf16.msra.mxu0 %v283
    %981 = vmatprep.subr.bf16.mxu0 0
    %982 = vmatpush1.bf16.msra.mxu0 %v282
    %983 = vmatprep.subr.bf16.mxu0 0
    %984 = vmatpush1.bf16.msra.mxu0 %v281
    %985 = vmatprep.subr.bf16.mxu0 0
    %986 = vmatpush2.bf16.msra.mxu0 %v296
    %987 = vmatprep.subr.bf16.mxu0 0
    %988 = vmatpush2.bf16.msra.mxu0 %v295
    %989 = vmatprep.subr.bf16.mxu0 0
    %990 = vmatpush2.bf16.msra.mxu0 %v294
    %991 = vmatprep.subr.bf16.mxu0 0
    %992 = vmatpush2.bf16.msra.mxu0 %v293
    %993 = vmatprep.subr.bf16.mxu0 0
    %994 = vmatpush2.bf16.msra.mxu0 %v292
    %995 = vmatprep.subr.bf16.mxu0 0
    %996 = vmatpush2.bf16.msra.mxu0 %v291
    %997 = vmatprep.subr.bf16.mxu0 0
    %998 = vmatpush2.bf16.msra.mxu0 %v290
    %999 = vmatprep.subr.bf16.mxu0 0
    %1000 = vmatpush2.bf16.msra.mxu0 %v289
    %1001 = vmatprep.mubr.bf16.mxu0 %v966
    %1002 = vmatmul.mubr.bf16.gmra.mxu0 %v965
    %v1003 = vpop.f32.mrf.mxu0
    %v1004 = vadd.f32 0.0, %v1003
    %v1005 = vpop.f32.mrf.mxu0
    %v1006 = vpop.f32.mrf.mxu0
    %v1007 = vadd.f32 0.0, %v1006
    %v1008 = vpop.f32.mrf.mxu0
    %1009 = vdwg.mxu0
    %1010 = vmatprep.subr.bf16.mxu0 0
    %1011 = vmatpush1.bf16.msra.mxu0 %v304
    %1012 = vmatprep.subr.bf16.mxu0 0
    %1013 = vmatpush1.bf16.msra.mxu0 %v303
    %1014 = vmatprep.subr.bf16.mxu0 0
    %1015 = vmatpush1.bf16.msra.mxu0 %v302
    %1016 = vmatprep.subr.bf16.mxu0 0
    %1017 = vmatpush1.bf16.msra.mxu0 %v301
    %1018 = vmatprep.subr.bf16.mxu0 0
    %1019 = vmatpush1.bf16.msra.mxu0 %v300
    %1020 = vmatprep.subr.bf16.mxu0 0
    %1021 = vmatpush1.bf16.msra.mxu0 %v299
    %1022 = vmatprep.subr.bf16.mxu0 0
    %1023 = vmatpush1.bf16.msra.mxu0 %v298
    %1024 = vmatprep.subr.bf16.mxu0 0
    %1025 = vmatpush1.bf16.msra.mxu0 %v297
    %1026 = vmatprep.subr.bf16.mxu0 0
    %1027 = vmatpush2.bf16.msra.mxu0 %v312
    %1028 = vmatprep.subr.bf16.mxu0 0
    %1029 = vmatpush2.bf16.msra.mxu0 %v311
    %1030 = vmatprep.subr.bf16.mxu0 0
    %1031 = vmatpush2.bf16.msra.mxu0 %v310
    %1032 = vmatprep.subr.bf16.mxu0 0
    %1033 = vmatpush2.bf16.msra.mxu0 %v309
    %1034 = vmatprep.subr.bf16.mxu0 0
    %1035 = vmatpush2.bf16.msra.mxu0 %v308
    %1036 = vmatprep.subr.bf16.mxu0 0
    %1037 = vmatpush2.bf16.msra.mxu0 %v307
    %1038 = vmatprep.subr.bf16.mxu0 0
    %1039 = vmatpush2.bf16.msra.mxu0 %v306
    %1040 = vmatprep.subr.bf16.mxu0 0
    %1041 = vmatpush2.bf16.msra.mxu0 %v305
    %1042 = vmatprep.mubr.bf16.mxu0 %v968
    %1043 = vmatmul.mubr.bf16.gmra.mxu0 %v967
    %v1044 = vpop.f32.mrf.mxu0
    %v1045 = vadd.f32 %v1004, %v1044
    %v1046 = vpop.f32.mrf.mxu0
    %v1047 = vpop.f32.mrf.mxu0
    %v1048 = vadd.f32 %v1007, %v1047
    %v1049 = vpop.f32.mrf.mxu0
    %1050 = vdwg.mxu0
    %1051 = vst.msk [vmem:[%s9 + $0x30] sm:$0xff] %vm451, %v1045
    %1052 = vst.msk [vmem:[%s9 + $0x38] sm:$0xff] %vm451, %v1048
    %s1053 = sld [smem:[#allocation2 + $0x4]]
    %v1054 = vstv %s1053
    %s1055 = sld [smem:[#allocation2 + $0x5]]
    %v1056 = vstv %s1055
    %v1057 = vmul.f32 %v1056, %v1045
    %v1058 = vmul.f32 %v1056, %v1048
    %v1059 = vadd.f32 %v1054, %v1057
    %v1060 = vadd.f32 %v1054, %v1058
    %v1061 = vmul.f32 %v1045, 2.0
    %v1062 = vmul.f32 %v1048, 2.0
    %v1063 = vmul.f32 %v1061, %v1045
    %v1064 = vmul.f32 %v1062, %v1048
    %v1065 = vsub.f32 %v1063, 1.0
    %v1066 = vsub.f32 %v1064, 1.0
    %s1067 = sld [smem:[#allocation2 + $0x6]]
    %v1068 = vstv %s1067
    %v1069 = vmul.f32 %v1068, %v1065
    %v1070 = vmul.f32 %v1068, %v1066
    %v1071 = vadd.f32 %v1059, %v1069
    %v1072 = vadd.f32 %v1060, %v1070
    %v1073 = vmul.f32 %v1061, %v1065
    %v1074 = vmul.f32 %v1062, %v1066
    %v1075 = vsub.f32 %v1073, %v1045
    %v1076 = vsub.f32 %v1074, %v1048
    %s1077 = sld [smem:[#allocation2 + $0x7]]
    %v1078 = vstv %s1077
    %v1079 = vmul.f32 %v1078, %v1075
    %v1080 = vmul.f32 %v1078, %v1076
    %v1081 = vadd.f32 %v1071, %v1079
    %v1082 = vadd.f32 %v1072, %v1080
    %1083 = vst.msk [vmem:[%s9 + $0x60] sm:$0xff] %vm451, %v1081
    %1084 = vst.msk [vmem:[%s9 + $0x68] sm:$0xff] %vm451, %v1082
    %s1085 = sld [smem:[#allocation2 + $0x80]]
    %s1086 = sld [smem:[#allocation2 + $0x81]]
    %s1087 = sld [smem:[#allocation2 + $0x82]]
    %s1088 = sld [smem:[#allocation2 + $0x83]]
    %v1089 = vld [vmem:[%s6] sm:$0xff]
    %v1090 = vld [vmem:[%s6 + $0x8] sm:$0xff]
    %v1091 = vld [vmem:[%s6 + $0x10] sm:$0xff]
    %v1092 = vld [vmem:[%s6 + $0x18] sm:$0xff]
    %v1093 = vld [vmem:[%s6 + $0x20] sm:$0xff]
    %v1094 = vld [vmem:[%s6 + $0x28] sm:$0xff]
    %v1095 = vld [vmem:[%s6 + $0x30] sm:$0xff]
    %v1096 = vld [vmem:[%s6 + $0x38] sm:$0xff]
    %v1097 = vld [vmem:[%s6 + $0x40] sm:$0xff]
    %v1098 = vld [vmem:[%s6 + $0x48] sm:$0xff]
    %v1099 = vld [vmem:[%s6 + $0x50] sm:$0xff]
    %v1100 = vld [vmem:[%s6 + $0x58] sm:$0xff]
    %v1101 = vld [vmem:[%s6 + $0x60] sm:$0xff]
    %v1102 = vld [vmem:[%s6 + $0x68] sm:$0xff]
    %v1103 = vld [vmem:[%s6 + $0x70] sm:$0xff]
    %v1104 = vld [vmem:[%s6 + $0x78] sm:$0xff]
    %v1105 = vld [vmem:[%s6 + $0x80] sm:$0xff]
    %v1106 = vld [vmem:[%s6 + $0x88] sm:$0xff]
    %v1107 = vld [vmem:[%s6 + $0x90] sm:$0xff]
    %v1108 = vld [vmem:[%s6 + $0x98] sm:$0xff]
    %v1109 = vld [vmem:[%s6 + $0xa0] sm:$0xff]
    %v1110 = vld [vmem:[%s6 + $0xa8] sm:$0xff]
    %v1111 = vld [vmem:[%s6 + $0xb0] sm:$0xff]
    %v1112 = vld [vmem:[%s6 + $0xb8] sm:$0xff]
    %v1113 = vld [vmem:[%s6 + $0xc0] sm:$0xff]
    %v1114 = vld [vmem:[%s6 + $0xc8] sm:$0xff]
    %v1115 = vld [vmem:[%s6 + $0xd0] sm:$0xff]
    %v1116 = vld [vmem:[%s6 + $0xd8] sm:$0xff]
    %v1117 = vld [vmem:[%s6 + $0xe0] sm:$0x1]
    %v1118 = vld [vmem:[%s4] sm:$0xf]
    %v1119 = vld [vmem:[%s4 + $0x4] sm:$0xf]
    %v1120 = vld [vmem:[%s4 + $0x8] sm:$0xf]
    %v1121 = vld [vmem:[%s4 + $0xc] sm:$0xf]
    %v1122 = vld [vmem:[%s7] sm:$0xf]
    %v1123 = vld [vmem:[%s7 + $0x4] sm:$0xf]
    %v1124 = vld [vmem:[%s7 + $0x8] sm:$0xf]
    %v1125 = vld [vmem:[%s7 + $0xc] sm:$0xf]
    %v1126 = vld [vmem:[%s7 + $0x10] sm:$0xf]
    %v1127 = vld [vmem:[%s7 + $0x14] sm:$0xf]
    %v1128 = vld [vmem:[%s7 + $0x18] sm:$0xf]
    %v1129 = vld [vmem:[%s7 + $0x1c] sm:$0xf]
    %v1130 = vld [vmem:[%s7 + $0x20] sm:$0xf]
    %v1131 = vld [vmem:[%s7 + $0x24] sm:$0xf]
    %v1132 = vld [vmem:[%s7 + $0x28] sm:$0xf]
    %v1133 = vld [vmem:[%s7 + $0x2c] sm:$0xf]
    %v1134 = vld [vmem:[%s7 + $0x30] sm:$0xf]
    %v1135 = vld [vmem:[%s7 + $0x34] sm:$0xf]
    %v1136 = vld [vmem:[%s7 + $0x38] sm:$0xf]
    %v1137 = vld [vmem:[%s7 + $0x3c] sm:$0xf]
    %v1142 = vunpack.c.l.b16 %v1118
    %v1143 = vunpack.c.l.b16 %v1119
    %v1144 = vunpack.c.l.b16 %v1120
    %v1145 = vunpack.c.l.b16 %v1121
    %v1146 = vpack.c.b16 %v1143, %v1142
    %v1147 = vpack.c.b16 %v1145, %v1144
    %v1166 = vunpack.c.l.b16 %v1122
    %v1167 = vunpack.c.l.b16 %v1123
    %v1168 = vunpack.c.l.b16 %v1124
    %v1169 = vunpack.c.l.b16 %v1125
    %v1170 = vunpack.c.l.b16 %v1126
    %v1171 = vunpack.c.l.b16 %v1127
    %v1172 = vunpack.c.l.b16 %v1128
    %v1173 = vunpack.c.l.b16 %v1129
    %v1174 = vunpack.c.l.b16 %v1130
    %v1175 = vunpack.c.l.b16 %v1131
    %v1176 = vunpack.c.l.b16 %v1132
    %v1177 = vunpack.c.l.b16 %v1133
    %v1178 = vunpack.c.l.b16 %v1134
    %v1179 = vunpack.c.l.b16 %v1135
    %v1180 = vunpack.c.l.b16 %v1136
    %v1181 = vunpack.c.l.b16 %v1137
    %v1182 = vpack.c.b16 %v1167, %v1166
    %v1183 = vpack.c.b16 %v1169, %v1168
    %v1184 = vpack.c.b16 %v1171, %v1170
    %v1185 = vpack.c.b16 %v1173, %v1172
    %v1186 = vpack.c.b16 %v1175, %v1174
    %v1187 = vpack.c.b16 %v1177, %v1176
    %v1188 = vpack.c.b16 %v1179, %v1178
    %v1189 = vpack.c.b16 %v1181, %v1180
    %1198 = vmatprep.subr.bf16.mxu0 0
    %1199 = vmatpush1.bf16.msra.mxu0 %v1189
    %1200 = vmatprep.subr.bf16.mxu0 0
    %1201 = vmatpush1.bf16.msra.mxu0 %v1188
    %1202 = vmatprep.subr.bf16.mxu0 0
    %1203 = vmatpush1.bf16.msra.mxu0 %v1187
    %1204 = vmatprep.subr.bf16.mxu0 0
    %1205 = vmatpush1.bf16.msra.mxu0 %v1186
    %1206 = vmatprep.subr.bf16.mxu0 0
    %1207 = vmatpush1.bf16.msra.mxu0 %v1185
    %1208 = vmatprep.subr.bf16.mxu0 0
    %1209 = vmatpush1.bf16.msra.mxu0 %v1184
    %1210 = vmatprep.subr.bf16.mxu0 0
    %1211 = vmatpush1.bf16.msra.mxu0 %v1183
    %1212 = vmatprep.subr.bf16.mxu0 0
    %1213 = vmatpush1.bf16.msra.mxu0 %v1182
    %1214 = vmatprep.subr.bf16.mxu0 0
    %1215 = vmatpush2.bf16.msra.mxu0 0
    %1216 = vmatprep.subr.bf16.mxu0 0
    %1217 = vmatpush2.bf16.msra.mxu0 0
    %1218 = vmatprep.subr.bf16.mxu0 0
    %1219 = vmatpush2.bf16.msra.mxu0 0
    %1220 = vmatprep.subr.bf16.mxu0 0
    %1221 = vmatpush2.bf16.msra.mxu0 0
    %1222 = vmatprep.subr.bf16.mxu0 0
    %1223 = vmatpush2.bf16.msra.mxu0 0
    %1224 = vmatprep.subr.bf16.mxu0 0
    %1225 = vmatpush2.bf16.msra.mxu0 0
    %1226 = vmatprep.subr.bf16.mxu0 0
    %1227 = vmatpush2.bf16.msra.mxu0 0
    %1228 = vmatprep.subr.bf16.mxu0 0
    %1229 = vmatpush2.bf16.msra.mxu0 0
    %1230 = vmatprep.mubr.bf16.mxu0 0
    %1231 = vmatmul.mubr.bf16.gmra.mxu0 %v1146
    %v1232 = vpop.f32.mrf.mxu0
    %v1233 = vadd.f32 0.0, %v1232
    %v1234 = vpop.f32.mrf.mxu0
    %v1235 = vpop.f32.mrf.mxu0
    %v1236 = vadd.f32 0.0, %v1235
    %v1237 = vpop.f32.mrf.mxu0
    %1238 = vmatprep.mubr.bf16.mxu0 0
    %1239 = vmatmul.mubr.bf16.gmra.mxu0 %v1147
    %v1240 = vpop.f32.mrf.mxu0
    %v1241 = vadd.f32 0.0, %v1240
    %v1242 = vpop.f32.mrf.mxu0
    %v1243 = vpop.f32.mrf.mxu0
    %v1244 = vadd.f32 0.0, %v1243
    %v1245 = vpop.f32.mrf.mxu0
    %1246 = vdwg.mxu0
    %1248 = vset.pattern.permute.xlu0 0
    %1249 = vperm.xlu0 %1248, %v1097
    %v1250 = vpop.permute.xlu0 %1249
    %1253 = vset.pattern.permute.xlu0 0
    %1254 = vperm.xlu0 %1253, %v1098
    %v1255 = vpop.permute.xlu0 %1254
    %1258 = vset.pattern.permute.xlu0 0
    %1259 = vperm.xlu0 %1258, %v1099
    %v1260 = vpop.permute.xlu0 %1259
    %1263 = vset.pattern.permute.xlu0 0
    %1264 = vperm.xlu0 %1263, %v1100
    %v1265 = vpop.permute.xlu0 %1264
    %v1267 = vmul.f32 %v1233, %v1250
    %v1268 = vmul.f32 %v1236, %v1255
    %v1269 = vmul.f32 %v1241, %v1260
    %v1270 = vmul.f32 %v1244, %v1265
    %1272 = vset.pattern.permute.xlu0 0
    %1273 = vperm.xlu0 %1272, %v1101
    %v1274 = vpop.permute.xlu0 %1273
    %1277 = vset.pattern.permute.xlu0 0
    %1278 = vperm.xlu0 %1277, %v1102
    %v1279 = vpop.permute.xlu0 %1278
    %1282 = vset.pattern.permute.xlu0 0
    %1283 = vperm.xlu0 %1282, %v1103
    %v1284 = vpop.permute.xlu0 %1283
    %1287 = vset.pattern.permute.xlu0 0
    %1288 = vperm.xlu0 %1287, %v1104
    %v1289 = vpop.permute.xlu0 %1288
    %v1291 = vadd.f32 %v1267, %v1274
    %v1292 = vadd.f32 %v1268, %v1279
    %v1293 = vadd.f32 %v1269, %v1284
    %v1294 = vadd.f32 %v1270, %v1289
    %1295 = vst.msk [vmem:[%s9 + $0x10] sm:$0xff] %vm451, %v1291
    %1296 = vst.msk [vmem:[%s9 + $0x18] sm:$0xff] %vm451, %v1292
    %1297 = vst.msk [vmem:[%s9 + $0x20] sm:$0xff] %vm451, %v1293
    %1298 = vst.msk [vmem:[%s9 + $0x28] sm:$0xff] %vm451, %v1294
    %v1299 = vld [vmem:[%s5] sm:$0xf]
    %v1300 = vld [vmem:[%s5 + $0x4] sm:$0xf]
    %v1301 = vld [vmem:[%s5 + $0x8] sm:$0xf]
    %v1302 = vld [vmem:[%s5 + $0xc] sm:$0xf]
    %v1303 = vld [vmem:[%s5 + $0x10] sm:$0xf]
    %v1304 = vld [vmem:[%s5 + $0x14] sm:$0xf]
    %v1305 = vld [vmem:[%s5 + $0x18] sm:$0xf]
    %v1306 = vld [vmem:[%s5 + $0x1c] sm:$0xf]
    %v1307 = vld [vmem:[%s5 + $0x20] sm:$0xf]
    %v1308 = vld [vmem:[%s5 + $0x24] sm:$0xf]
    %v1309 = vld [vmem:[%s5 + $0x28] sm:$0xf]
    %v1310 = vld [vmem:[%s5 + $0x2c] sm:$0xf]
    %v1311 = vld [vmem:[%s5 + $0x30] sm:$0x1]
    %1313 = vset.pattern.permute.xlu0 0
    %1314 = vperm.xlu0 %1313, %v1105
    %v1315 = vpop.permute.xlu0 %1314
    %1318 = vset.pattern.permute.xlu0 0
    %1319 = vperm.xlu0 %1318, %v1106
    %v1320 = vpop.permute.xlu0 %1319
    %1323 = vset.pattern.permute.xlu0 0
    %1324 = vperm.xlu0 %1323, %v1107
    %v1325 = vpop.permute.xlu0 %1324
    %1328 = vset.pattern.permute.xlu0 0
    %1329 = vperm.xlu0 %1328, %v1108
    %v1330 = vpop.permute.xlu0 %1329
    %1333 = vset.pattern.permute.xlu0 0
    %1334 = vperm.xlu0 %1333, %v1109
    %v1335 = vpop.permute.xlu0 %1334
    %1338 = vset.pattern.permute.xlu0 0
    %1339 = vperm.xlu0 %1338, %v1110
    %v1340 = vpop.permute.xlu0 %1339
    %1343 = vset.pattern.permute.xlu0 0
    %1344 = vperm.xlu0 %1343, %v1111
    %v1345 = vpop.permute.xlu0 %1344
    %1348 = vset.pattern.permute.xlu0 0
    %1349 = vperm.xlu0 %1348, %v1112
    %v1350 = vpop.permute.xlu0 %1349
    %1353 = vset.pattern.permute.xlu0 0
    %1354 = vperm.xlu0 %1353, %v1113
    %v1355 = vpop.permute.xlu0 %1354
    %1358 = vset.pattern.permute.xlu0 0
    %1359 = vperm.xlu0 %1358, %v1114
    %v1360 = vpop.permute.xlu0 %1359
    %1363 = vset.pattern.permute.xlu0 0
    %1364 = vperm.xlu0 %1363, %v1115
    %v1365 = vpop.permute.xlu0 %1364
    %1368 = vset.pattern.permute.xlu0 0
    %1369 = vperm.xlu0 %1368, %v1116
    %v1370 = vpop.permute.xlu0 %1369
    %1373 = vset.pattern.permute.xlu0 0
    %1374 = vperm.xlu0 %1373, %v1117
    %v1375 = vpop.permute.xlu0 %1374
    %v1390 = vunpack.c.l.b16 %v1299
    %v1391 = vunpack.c.l.b16 %v1300
    %v1392 = vunpack.c.l.b16 %v1301
    %v1393 = vunpack.c.l.b16 %v1302
    %v1394 = vunpack.c.l.b16 %v1303
    %v1395 = vunpack.c.l.b16 %v1304
    %v1396 = vunpack.c.l.b16 %v1305
    %v1397 = vunpack.c.l.b16 %v1306
    %v1398 = vunpack.c.l.b16 %v1307
    %v1399 = vunpack.c.l.b16 %v1308
    %v1400 = vunpack.c.l.b16 %v1309
    %v1401 = vunpack.c.l.b16 %v1310
    %v1402 = vunpack.c.l.b16 %v1311
    %v1403 = vpack.c.b16 %v1391, %v1390
    %v1404 = vpack.c.b16 %v1393, %v1392
    %v1405 = vpack.c.b16 %v1395, %v1394
    %v1406 = vpack.c.b16 %v1397, %v1396
    %v1407 = vpack.c.b16 %v1399, %v1398
    %v1408 = vpack.c.b16 %v1401, %v1400
    %v1409 = vpack.c.b16 %v1402, %v1402
    %vm1410 = vcmask 261120
    %v1412 = vsel %vm1410, %v1403, 0
    %v1415 = vsel %vm1410, %v1404, 0
    %v1418 = vsel %vm1410, %v1405, 0
    %v1421 = vsel %vm1410, %v1406, 0
    %v1424 = vsel %vm1410, %v1407, 0
    %v1427 = vsel %vm1410, %v1408, 0
    %v1430 = vsel %vm1410, %v1409, 0
    %1432 = vmatprep.subr.bf16.mxu0 0
    %1433 = vmatpush1.bf16.msra.mxu0 0
    %1434 = vmatprep.subr.bf16.mxu0 0
    %1435 = vmatpush1.bf16.msra.mxu0 0
    %1436 = vmatprep.subr.bf16.mxu0 0
    %1437 = vmatpush1.bf16.msra.mxu0 0
    %1438 = vmatprep.subr.bf16.mxu0 0
    %1439 = vmatpush1.bf16.msra.mxu0 0
    %1440 = vmatprep.subr.bf16.mxu0 0
    %1441 = vmatpush1.bf16.msra.mxu0 0
    %1442 = vmatprep.subr.bf16.mxu0 0
    %1443 = vmatpush1.bf16.msra.mxu0 0
    %1444 = vmatprep.subr.bf16.mxu0 0
    %1445 = vmatpush1.bf16.msra.mxu0 %v1147
    %1446 = vmatprep.subr.bf16.mxu0 0
    %1447 = vmatpush1.bf16.msra.mxu0 %v1146
    %1448 = vmatprep.subr.bf16.mxu0 0
    %1449 = vmatpush2.bf16.msra.mxu0 0
    %1450 = vmatprep.subr.bf16.mxu0 0
    %1451 = vmatpush2.bf16.msra.mxu0 0
    %1452 = vmatprep.subr.bf16.mxu0 0
    %1453 = vmatpush2.bf16.msra.mxu0 0
    %1454 = vmatprep.subr.bf16.mxu0 0
    %1455 = vmatpush2.bf16.msra.mxu0 0
    %1456 = vmatprep.subr.bf16.mxu0 0
    %1457 = vmatpush2.bf16.msra.mxu0 0
    %1458 = vmatprep.subr.bf16.mxu0 0
    %1459 = vmatpush2.bf16.msra.mxu0 0
    %1460 = vmatprep.subr.bf16.mxu0 0
    %1461 = vmatpush2.bf16.msra.mxu0 0
    %1462 = vmatprep.subr.bf16.mxu0 0
    %1463 = vmatpush2.bf16.msra.mxu0 0
    %1464 = vmatprep.mubr.bf16.mxu0 0
    %1465 = vmatmul.mubr.bf16.gmra.mxu0 %v1412
    %v1466 = vpop.f32.mrf.mxu0
    %v1467 = vadd.f32 %v1315, %v1466
    %v1468 = vpop.f32.mrf.mxu0
    %v1469 = vpop.f32.mrf.mxu0
    %v1470 = vadd.f32 %v1320, %v1469
    %v1471 = vpop.f32.mrf.mxu0
    %1472 = vmatprep.mubr.bf16.mxu0 0
    %1473 = vmatmul.mubr.bf16.gmra.mxu0 %v1415
    %v1474 = vpop.f32.mrf.mxu0
    %v1475 = vadd.f32 %v1325, %v1474
    %v1476 = vpop.f32.mrf.mxu0
    %v1477 = vpop.f32.mrf.mxu0
    %v1478 = vadd.f32 %v1330, %v1477
    %v1479 = vpop.f32.mrf.mxu0
    %1480 = vmatprep.mubr.bf16.mxu0 0
    %1481 = vmatmul.mubr.bf16.gmra.mxu0 %v1418
    %v1482 = vpop.f32.mrf.mxu0
    %v1483 = vadd.f32 %v1335, %v1482
    %v1484 = vpop.f32.mrf.mxu0
    %v1485 = vpop.f32.mrf.mxu0
    %v1486 = vadd.f32 %v1340, %v1485
    %v1487 = vpop.f32.mrf.mxu0
    %1488 = vmatprep.mubr.bf16.mxu0 0
    %1489 = vmatmul.mubr.bf16.gmra.mxu0 %v1421
    %v1490 = vpop.f32.mrf.mxu0
    %v1491 = vadd.f32 %v1345, %v1490
    %v1492 = vpop.f32.mrf.mxu0
    %v1493 = vpop.f32.mrf.mxu0
    %v1494 = vadd.f32 %v1350, %v1493
    %v1495 = vpop.f32.mrf.mxu0
    %1496 = vmatprep.mubr.bf16.mxu0 0
    %1497 = vmatmul.mubr.bf16.gmra.mxu0 %v1424
    %v1498 = vpop.f32.mrf.mxu0
    %v1499 = vadd.f32 %v1355, %v1498
    %v1500 = vpop.f32.mrf.mxu0
    %v1501 = vpop.f32.mrf.mxu0
    %v1502 = vadd.f32 %v1360, %v1501
    %v1503 = vpop.f32.mrf.mxu0
    %1504 = vmatprep.mubr.bf16.mxu0 0
    %1505 = vmatmul.mubr.bf16.gmra.mxu0 %v1427
    %v1506 = vpop.f32.mrf.mxu0
    %v1507 = vadd.f32 %v1365, %v1506
    %v1508 = vpop.f32.mrf.mxu0
    %v1509 = vpop.f32.mrf.mxu0
    %v1510 = vadd.f32 %v1370, %v1509
    %v1511 = vpop.f32.mrf.mxu0
    %1512 = vmatprep.mubr.bf16.mxu0 0
    %1513 = vmatmul.mubr.bf16.gmra.mxu0 %v1430
    %v1514 = vpop.f32.mrf.mxu0
    %v1515 = vadd.f32 %v1375, %v1514
    %v1516 = vpop.f32.mrf.mxu0
    %v1517 = vpop.f32.mrf.mxu0
    %v1518 = vpop.f32.mrf.mxu0
    %1519 = vdwg.mxu0
    %v1520 = vmax.f32 %v1467, %v1470
    %v1521 = vmax.f32 %v1475, %v1478
    %v1522 = vmax.f32 %v1520, %v1521
    %v1523 = vrot.slane %v1522, 4
    %v1524 = vmax.f32 %v1522, %v1523
    %v1525 = vrot.slane %v1524, 2
    %v1526 = vmax.f32 %v1524, %v1525
    %v1527 = vrot.slane %v1526, 1
    %v1528 = vmax.f32 %v1526, %v1527
    %v1529 = vstv %s1085
    %v1530 = vmul.f32 %v1529, %v1515
    %v1531 = vstv %s1086
    %v1532 = vmul.f32 %v1531, %v1528
    %v1533 = vadd.f32 %v1530, %v1532
    %v1534 = vxor.u32 %v1533, 2147483648
    %v1535 = vmul.f32 %v1534, 1.442695
    %v1536 = vpow.pop %v1535
    %v1537 = vadd.f32 %v1536, 1.0
    %v1538 = vrcp.pop %v1537
    %v1539 = vmul.f32 1.0, %v1538
    %v1540 = vlaneseq
    %v1541 = vshrl.u32 %v1540, 7
    %v1542 = vsub.s32 0, %v1541
    %v1543 = vrot.slane %v1539, %v1542
    %v1544 = vmul.f32 %v1467, %v1543
    %v1545 = vmul.f32 %v1470, %v1543
    %v1546 = vmul.f32 %v1475, %v1543
    %v1547 = vmul.f32 %v1478, %v1543
    %v1548 = vadd.f32 %v1544, %v1467
    %v1549 = vadd.f32 %v1545, %v1470
    %v1550 = vadd.f32 %v1546, %v1475
    %v1551 = vadd.f32 %v1547, %v1478
    %1553 = vset.pattern.permute.xlu0 0
    %1554 = vperm.xlu0 %1553, %v1089
    %v1555 = vpop.permute.xlu0 %1554
    %1558 = vset.pattern.permute.xlu0 0
    %1559 = vperm.xlu0 %1558, %v1090
    %v1560 = vpop.permute.xlu0 %1559
    %1563 = vset.pattern.permute.xlu0 0
    %1564 = vperm.xlu0 %1563, %v1091
    %v1565 = vpop.permute.xlu0 %1564
    %1568 = vset.pattern.permute.xlu0 0
    %1569 = vperm.xlu0 %1568, %v1092
    %v1570 = vpop.permute.xlu0 %1569
    %v1572 = vmul.f32 %v1548, %v1555
    %v1573 = vmul.f32 %v1549, %v1560
    %v1574 = vmul.f32 %v1550, %v1565
    %v1575 = vmul.f32 %v1551, %v1570
    %1577 = vset.pattern.permute.xlu0 0
    %1578 = vperm.xlu0 %1577, %v1093
    %v1579 = vpop.permute.xlu0 %1578
    %1582 = vset.pattern.permute.xlu0 0
    %1583 = vperm.xlu0 %1582, %v1094
    %v1584 = vpop.permute.xlu0 %1583
    %1587 = vset.pattern.permute.xlu0 0
    %1588 = vperm.xlu0 %1587, %v1095
    %v1589 = vpop.permute.xlu0 %1588
    %1592 = vset.pattern.permute.xlu0 0
    %1593 = vperm.xlu0 %1592, %v1096
    %v1594 = vpop.permute.xlu0 %1593
    %v1596 = vadd.f32 %v1572, %v1579
    %v1597 = vadd.f32 %v1573, %v1584
    %v1598 = vadd.f32 %v1574, %v1589
    %v1599 = vadd.f32 %v1575, %v1594
    %v1600 = vmul.f32 %v1596, 0.5
    %v1601 = vmul.f32 %v1597, 0.5
    %v1602 = vmul.f32 %v1598, 0.5
    %v1603 = vmul.f32 %v1599, 0.5
    %v1604 = vmul.f32 %v1596, 0.70710677
    %v1605 = vmul.f32 %v1597, 0.70710677
    %v1606 = vmul.f32 %v1598, 0.70710677
    %v1607 = vmul.f32 %v1599, 0.70710677
    %v1608 = verf.f32.pop %v1604
    %v1609 = verf.f32.pop %v1605
    %v1610 = verf.f32.pop %v1606
    %v1611 = verf.f32.pop %v1607
    %v1612 = vadd.f32 %v1608, 1.0
    %v1613 = vadd.f32 %v1609, 1.0
    %v1614 = vadd.f32 %v1610, 1.0
    %v1615 = vadd.f32 %v1611, 1.0
    %v1616 = vmul.f32 %v1600, %v1612
    %v1617 = vmul.f32 %v1601, %v1613
    %v1618 = vmul.f32 %v1602, %v1614
    %v1619 = vmul.f32 %v1603, %v1615
    %v1620 = vstv %s1087
    %v1621 = vmul.f32 %v1620, %v1616
    %v1622 = vmul.f32 %v1620, %v1617
    %v1623 = vmul.f32 %v1620, %v1618
    %v1624 = vmul.f32 %v1620, %v1619
    %v1625 = vmul.f32 %v1483, 0.5
    %v1626 = vmul.f32 %v1486, 0.5
    %v1627 = vmul.f32 %v1491, 0.5
    %v1628 = vmul.f32 %v1494, 0.5
    %v1629 = vmul.f32 %v1483, 0.70710677
    %v1630 = vmul.f32 %v1486, 0.70710677
    %v1631 = vmul.f32 %v1491, 0.70710677
    %v1632 = vmul.f32 %v1494, 0.70710677
    %v1633 = verf.f32.pop %v1629
    %v1634 = verf.f32.pop %v1630
    %v1635 = verf.f32.pop %v1631
    %v1636 = verf.f32.pop %v1632
    %v1637 = vadd.f32 %v1633, 1.0
    %v1638 = vadd.f32 %v1634, 1.0
    %v1639 = vadd.f32 %v1635, 1.0
    %v1640 = vadd.f32 %v1636, 1.0
    %v1641 = vmul.f32 %v1625, %v1637
    %v1642 = vmul.f32 %v1626, %v1638
    %v1643 = vmul.f32 %v1627, %v1639
    %v1644 = vmul.f32 %v1628, %v1640
    %v1645 = vstv %s1088
    %v1646 = vmul.f32 %v1645, %v1641
    %v1647 = vmul.f32 %v1645, %v1642
    %v1648 = vmul.f32 %v1645, %v1643
    %v1649 = vmul.f32 %v1645, %v1644
    %v1650 = vadd.f32 %v1621, %v1646
    %v1651 = vadd.f32 %v1622, %v1647
    %v1652 = vadd.f32 %v1623, %v1648
    %v1653 = vadd.f32 %v1624, %v1649
    %v1654 = vmul.f32 %v1499, 0.5
    %v1655 = vmul.f32 %v1502, 0.5
    %v1656 = vmul.f32 %v1507, 0.5
    %v1657 = vmul.f32 %v1510, 0.5
    %v1658 = vmul.f32 %v1499, 0.70710677
    %v1659 = vmul.f32 %v1502, 0.70710677
    %v1660 = vmul.f32 %v1507, 0.70710677
    %v1661 = vmul.f32 %v1510, 0.70710677
    %v1662 = verf.f32.pop %v1658
    %v1663 = verf.f32.pop %v1659
    %v1664 = verf.f32.pop %v1660
    %v1665 = verf.f32.pop %v1661
    %v1666 = vadd.f32 %v1662, 1.0
    %v1667 = vadd.f32 %v1663, 1.0
    %v1668 = vadd.f32 %v1664, 1.0
    %v1669 = vadd.f32 %v1665, 1.0
    %v1670 = vmul.f32 %v1654, %v1666
    %v1671 = vmul.f32 %v1655, %v1667
    %v1672 = vmul.f32 %v1656, %v1668
    %v1673 = vmul.f32 %v1657, %v1669
    %v1674 = vmul.f32 %v1645, %v1670
    %v1675 = vmul.f32 %v1645, %v1671
    %v1676 = vmul.f32 %v1645, %v1672
    %v1677 = vmul.f32 %v1645, %v1673
    %v1678 = vadd.f32 %v1650, %v1674
    %v1679 = vadd.f32 %v1651, %v1675
    %v1680 = vadd.f32 %v1652, %v1676
    %v1681 = vadd.f32 %v1653, %v1677
    %v1682 = vpack.c.bf16 %v1679, %v1678
    %v1683 = vpack.c.bf16 %v1681, %v1680
    %1684 = vmatprep.subr.bf16.mxu0 0
    %1685 = vmatpush1.bf16.msra.mxu0 %v1189
    %1686 = vmatprep.subr.bf16.mxu0 0
    %1687 = vmatpush1.bf16.msra.mxu0 %v1188
    %1688 = vmatprep.subr.bf16.mxu0 0
    %1689 = vmatpush1.bf16.msra.mxu0 %v1187
    %1690 = vmatprep.subr.bf16.mxu0 0
    %1691 = vmatpush1.bf16.msra.mxu0 %v1186
    %1692 = vmatprep.subr.bf16.mxu0 0
    %1693 = vmatpush1.bf16.msra.mxu0 %v1185
    %1694 = vmatprep.subr.bf16.mxu0 0
    %1695 = vmatpush1.bf16.msra.mxu0 %v1184
    %1696 = vmatprep.subr.bf16.mxu0 0
    %1697 = vmatpush1.bf16.msra.mxu0 %v1183
    %1698 = vmatprep.subr.bf16.mxu0 0
    %1699 = vmatpush1.bf16.msra.mxu0 %v1182
    %1700 = vmatprep.subr.bf16.mxu0 0
    %1701 = vmatpush2.bf16.msra.mxu0 0
    %1702 = vmatprep.subr.bf16.mxu0 0
    %1703 = vmatpush2.bf16.msra.mxu0 0
    %1704 = vmatprep.subr.bf16.mxu0 0
    %1705 = vmatpush2.bf16.msra.mxu0 0
    %1706 = vmatprep.subr.bf16.mxu0 0
    %1707 = vmatpush2.bf16.msra.mxu0 0
    %1708 = vmatprep.subr.bf16.mxu0 0
    %1709 = vmatpush2.bf16.msra.mxu0 0
    %1710 = vmatprep.subr.bf16.mxu0 0
    %1711 = vmatpush2.bf16.msra.mxu0 0
    %1712 = vmatprep.subr.bf16.mxu0 0
    %1713 = vmatpush2.bf16.msra.mxu0 0
    %1714 = vmatprep.subr.bf16.mxu0 0
    %1715 = vmatpush2.bf16.msra.mxu0 0
    %1716 = vmatprep.mubr.bf16.mxu0 0
    %1717 = vmatmul.mubr.bf16.gmra.mxu0 %v1682
    %v1718 = vpop.f32.mrf.mxu0
    %v1719 = vadd.f32 0.0, %v1718
    %v1720 = vpop.f32.mrf.mxu0
    %v1721 = vpop.f32.mrf.mxu0
    %v1722 = vadd.f32 0.0, %v1721
    %v1723 = vpop.f32.mrf.mxu0
    %1724 = vmatprep.mubr.bf16.mxu0 0
    %1725 = vmatmul.mubr.bf16.gmra.mxu0 %v1683
    %v1726 = vpop.f32.mrf.mxu0
    %v1727 = vadd.f32 0.0, %v1726
    %v1728 = vpop.f32.mrf.mxu0
    %v1729 = vpop.f32.mrf.mxu0
    %v1730 = vadd.f32 0.0, %v1729
    %v1731 = vpop.f32.mrf.mxu0
    %1732 = vdwg.mxu0
    %1733 = vst.msk [vmem:[%s9 + $0x40] sm:$0xff] %vm451, %v1719
    %1734 = vst.msk [vmem:[%s9 + $0x48] sm:$0xff] %vm451, %v1722
    %1735 = vst.msk [vmem:[%s9 + $0x50] sm:$0xff] %vm451, %v1727
    %1736 = vst.msk [vmem:[%s9 + $0x58] sm:$0xff] %vm451, %v1730
    %s1737 = sld [smem:[#allocation2 + $0x84]]
    %v1738 = vstv %s1737
    %s1739 = sld [smem:[#allocation2 + $0x85]]
    %v1740 = vstv %s1739
    %v1741 = vmul.f32 %v1740, %v1719
    %v1742 = vmul.f32 %v1740, %v1722
    %v1743 = vmul.f32 %v1740, %v1727
    %v1744 = vmul.f32 %v1740, %v1730
    %v1745 = vadd.f32 %v1738, %v1741
    %v1746 = vadd.f32 %v1738, %v1742
    %v1747 = vadd.f32 %v1738, %v1743
    %v1748 = vadd.f32 %v1738, %v1744
    %v1749 = vmul.f32 %v1719, 2.0
    %v1750 = vmul.f32 %v1722, 2.0
    %v1751 = vmul.f32 %v1727, 2.0
    %v1752 = vmul.f32 %v1730, 2.0
    %v1753 = vmul.f32 %v1749, %v1719
    %v1754 = vmul.f32 %v1750, %v1722
    %v1755 = vmul.f32 %v1751, %v1727
    %v1756 = vmul.f32 %v1752, %v1730
    %v1757 = vsub.f32 %v1753, 1.0
    %v1758 = vsub.f32 %v1754, 1.0
    %v1759 = vsub.f32 %v1755, 1.0
    %v1760 = vsub.f32 %v1756, 1.0
    %s1761 = sld [smem:[#allocation2 + $0x86]]
    %v1762 = vstv %s1761
    %v1763 = vmul.f32 %v1762, %v1757
    %v1764 = vmul.f32 %v1762, %v1758
    %v1765 = vmul.f32 %v1762, %v1759
    %v1766 = vmul.f32 %v1762, %v1760
    %v1767 = vadd.f32 %v1745, %v1763
    %v1768 = vadd.f32 %v1746, %v1764
    %v1769 = vadd.f32 %v1747, %v1765
    %v1770 = vadd.f32 %v1748, %v1766
    %v1771 = vmul.f32 %v1749, %v1757
    %v1772 = vmul.f32 %v1750, %v1758
    %v1773 = vmul.f32 %v1751, %v1759
    %v1774 = vmul.f32 %v1752, %v1760
    %v1775 = vsub.f32 %v1771, %v1719
    %v1776 = vsub.f32 %v1772, %v1722
    %v1777 = vsub.f32 %v1773, %v1727
    %v1778 = vsub.f32 %v1774, %v1730
    %s1779 = sld [smem:[#allocation2 + $0x87]]
    %v1780 = vstv %s1779
    %v1781 = vmul.f32 %v1780, %v1775
    %v1782 = vmul.f32 %v1780, %v1776
    %v1783 = vmul.f32 %v1780, %v1777
    %v1784 = vmul.f32 %v1780, %v1778
    %v1785 = vadd.f32 %v1767, %v1781
    %v1786 = vadd.f32 %v1768, %v1782
    %v1787 = vadd.f32 %v1769, %v1783
    %v1788 = vadd.f32 %v1770, %v1784
    %1789 = vst.msk [vmem:[%s9 + $0x70] sm:$0xff] %vm451, %v1785
    %1790 = vst.msk [vmem:[%s9 + $0x78] sm:$0xff] %vm451, %v1786
    %1791 = vst.msk [vmem:[%s9 + $0x80] sm:$0xff] %vm451, %v1787
    %1792 = vst.msk [vmem:[%s9 + $0x88] sm:$0xff] %vm451, %v1788
    // Predicated region
    $region42: #{captn_forward.1} parent=1 // pred_check
      _
    $region43: #{captn_forward.1} parent=1 // pred_check_branch
      %1794 = sbr.rel (0) target = $region45
    $region44: #{captn_forward.1} parent=1 // pred_region
      _
    $region45: #{captn_forward.1} parent=1 // pred_fallthru
      _
    // Predicated region
    $region46: #{captn_forward.1} parent=1 // pred_check
      _
    $region47: #{captn_forward.1} parent=1 // pred_check_branch
      %1796 = sbr.rel (0) target = $region49
    $region48: #{captn_forward.1} parent=1 // pred_region
      _
    $region49: #{captn_forward.1} parent=1 // pred_fallthru
      _
    %1797 = vsyncpa [#allocation3], 1

</llo_original>
